<compile_context>
chip_gen: v7x
topology: tpu7x:2x2x1
jax: 0.10.0
libtpu: 0.0.40
codegen_flags: <defaults>
</compile_context>

<pallas_src>
import functools

import jax
import jax.numpy as jnp
from jax.experimental import pallas as pl
from jax.experimental.pallas import tpu as pltpu


# ----------------------------- tiling helpers ------------------------------

def _pick_tile(dim, target, align):
    """Largest multiple of `align` <= target that evenly divides `dim`;
    falls back to the full dim (a full-extent block is always legal)."""
    if dim <= target:
        return dim
    t = (target // align) * align
    while t >= align:
        if dim % t == 0:
            return t
        t -= align
    return dim


# ----------------------------- tiled linear --------------------------------

def _matmul_kernel(x_ref, w_ref, o_ref, acc_ref):
    @pl.when(pl.program_id(2) == 0)
    def _init():
        acc_ref[...] = jnp.zeros_like(acc_ref)

    acc_ref[...] += jnp.dot(x_ref[...], w_ref[...],
                            preferred_element_type=jnp.float32)

    @pl.when(pl.program_id(2) == pl.num_programs(2) - 1)
    def _done():
        o_ref[...] = acc_ref[...].astype(o_ref.dtype)


def _matmul_bias_kernel(x_ref, w_ref, b_ref, o_ref, acc_ref):
    @pl.when(pl.program_id(2) == 0)
    def _init():
        acc_ref[...] = jnp.zeros_like(acc_ref)

    acc_ref[...] += jnp.dot(x_ref[...], w_ref[...],
                            preferred_element_type=jnp.float32)

    @pl.when(pl.program_id(2) == pl.num_programs(2) - 1)
    def _done():
        o_ref[...] = (acc_ref[...] + b_ref[...].astype(jnp.float32)
                      ).astype(o_ref.dtype)


def pallas_linear(x2d, w, b=None, *, tm=256, tn=512, tk=256):
    """y = x2d @ w (+ b).  x2d: (M, K), w: (K, N), b: (N,) or None."""
    M, K = x2d.shape
    K2, N = w.shape
    assert K == K2
    tm = _pick_tile(M, tm, 8)
    tn = _pick_tile(N, tn, 128)
    tk = _pick_tile(K, tk, 128)
    grid = (M // tm, N // tn, K // tk)

    bytes_per = jnp.dtype(x2d.dtype).itemsize
    cost = pl.CostEstimate(
        flops=2 * M * N * K,
        transcendentals=0,
        bytes_accessed=(M * K + K * N + M * N) * bytes_per,
    )

    x_spec = pl.BlockSpec((tm, tk), lambda i, j, k: (i, k))
    w_spec = pl.BlockSpec((tk, tn), lambda i, j, k: (k, j))
    o_spec = pl.BlockSpec((tm, tn), lambda i, j, k: (i, j))
    scratch = [pltpu.VMEM((tm, tn), jnp.float32)]
    cparams = pltpu.CompilerParams(
        dimension_semantics=("parallel", "parallel", "arbitrary"))
    out_shape = jax.ShapeDtypeStruct((M, N), x2d.dtype)

    if b is None:
        return pl.pallas_call(
            _matmul_kernel,
            out_shape=out_shape,
            grid_spec=pltpu.PrefetchScalarGridSpec(
                num_scalar_prefetch=0, grid=grid,
                in_specs=[x_spec, w_spec],
                out_specs=o_spec, scratch_shapes=scratch),
            compiler_params=cparams,
            cost_estimate=cost,
        )(x2d, w)

    b2d = b.reshape(1, N)
    b_spec = pl.BlockSpec((1, tn), lambda i, j, k: (0, j))
    return pl.pallas_call(
        _matmul_bias_kernel,
        out_shape=out_shape,
        grid_spec=pltpu.PrefetchScalarGridSpec(
            num_scalar_prefetch=0, grid=grid,
            in_specs=[x_spec, w_spec, b_spec],
            out_specs=o_spec, scratch_shapes=scratch),
        compiler_params=cparams,
        cost_estimate=cost,
    )(x2d, w, b2d)


# ----------------------------- flash attention ------------------------------

def _flash_attn_kernel(q_ref, k_ref, v_ref, o_ref, m_ref, l_ref, acc_ref,
                       *, scale):
    kv = pl.program_id(2)

    @pl.when(kv == 0)
    def _init():
        m_ref[...] = jnp.full_like(m_ref, -jnp.inf)
        l_ref[...] = jnp.zeros_like(l_ref)
        acc_ref[...] = jnp.zeros_like(acc_ref)

    # One batch element per grid step; all heads batched in the einsum.
    q = q_ref[0].astype(jnp.float32) * scale        # (H, Tq, D)  scale folded in
    k = k_ref[0].astype(jnp.float32)                # (H, Tk, D)
    v = v_ref[0]                                    # (H, Tk, D)

    # scores: contract over d with K in its natural (Tk, D) layout (no .T).
    s = jnp.einsum("hqd,hkd->hqk", q, k,
                   preferred_element_type=jnp.float32)      # (H, Tq, Tk)

    m_prev = m_ref[...]                                      # (H, Tq, 1)
    m_new = jnp.maximum(m_prev, jnp.max(s, axis=-1, keepdims=True))
    alpha = jnp.exp(m_prev - m_new)
    p = jnp.exp(s - m_new)
    l_ref[...] = alpha * l_ref[...] + jnp.sum(p, axis=-1, keepdims=True)
    acc_ref[...] = alpha * acc_ref[...] + jnp.einsum(
        "hqk,hkd->hqd", p.astype(v.dtype), v,
        preferred_element_type=jnp.float32)
    m_ref[...] = m_new

    @pl.when(kv == pl.num_programs(2) - 1)
    def _finish():
        inv_l = pl.reciprocal(l_ref[...], approx=True)       # EUP slot, ~free
        o_ref[0] = (acc_ref[...] * inv_l).astype(o_ref.dtype)


def pallas_attention(q, k, v, *, scale, tq=128, tk=128):
    """q, k, v: (B, H, N, D).  Returns softmax(scale * q @ k^T) @ v per head."""
    B, H, Nq, D = q.shape
    Nk = k.shape[2]
    Tq = _pick_tile(Nq, tq, 8)
    Tk = _pick_tile(Nk, tk, 8)
    grid = (B, Nq // Tq, Nk // Tk)

    bytes_per = jnp.dtype(q.dtype).itemsize
    cost = pl.CostEstimate(
        flops=4 * B * H * Nq * Nk * D,
        transcendentals=B * H * Nq * Nk,
        bytes_accessed=(2 * q.size + k.size + v.size) * bytes_per,
    )

    kernel = functools.partial(_flash_attn_kernel, scale=scale)
    return pl.pallas_call(
        kernel,
        out_shape=jax.ShapeDtypeStruct((B, H, Nq, D), q.dtype),
        grid_spec=pltpu.PrefetchScalarGridSpec(
            num_scalar_prefetch=0,
            grid=grid,
            in_specs=[
                pl.BlockSpec((1, H, Tq, D), lambda b, i, j: (b, 0, i, 0)),
                pl.BlockSpec((1, H, Tk, D), lambda b, i, j: (b, 0, j, 0)),
                pl.BlockSpec((1, H, Tk, D), lambda b, i, j: (b, 0, j, 0)),
            ],
            out_specs=pl.BlockSpec((1, H, Tq, D), lambda b, i, j: (b, 0, i, 0)),
            scratch_shapes=[
                pltpu.VMEM((H, Tq, 1), jnp.float32),   # running max
                pltpu.VMEM((H, Tq, 1), jnp.float32),   # running sum
                pltpu.VMEM((H, Tq, D), jnp.float32),   # output accumulator
            ],
        ),
        compiler_params=pltpu.CompilerParams(
            dimension_semantics=("parallel", "parallel", "arbitrary")),
        cost_estimate=cost,
    )(q, k, v)


# ----------------------------- forward pass ---------------------------------

def cross_attention_forward(params, x, context=None):
    heads = params["heads"]
    dim_head = params["dim_head"]
    inner_dim = heads * dim_head
    scale = dim_head ** (-0.5)

    B, Nq, _ = x.shape

    if context is None:
        # Self-attention: fused Q|K|V projection — x streamed from HBM once.
        qkv = pallas_linear(x.reshape(B * Nq, -1), params["w_qkv"])
        qkv = qkv.reshape(B, Nq, 3, heads, dim_head)
        # TODO(synk): fold this head split ('b n 3 h d -> 3 b h n d') into the
        # attention BlockSpec index_map to remove the extra HBM round trip.
        qkv = jnp.transpose(qkv, (2, 0, 3, 1, 4))            # (3, B, H, N, D)
        q, k, v = qkv[0], qkv[1], qkv[2]
    else:
        ctx = context
        Nk = ctx.shape[1]
        q = pallas_linear(x.reshape(B * Nq, -1), params["wq"])
        q = jnp.transpose(q.reshape(B, Nq, heads, dim_head), (0, 2, 1, 3))
        kv = pallas_linear(ctx.reshape(B * Nk, -1), params["w_kv"])
        kv = jnp.transpose(kv.reshape(B, Nk, 2, heads, dim_head),
                           (2, 0, 3, 1, 4))                  # (2, B, H, Nk, D)
        k, v = kv[0], kv[1]

    # dim_head**-0.5 is folded into the attention kernel (applied to q inside
    # the MXU loop) — numerically equivalent to the torch `k_in * self.scale`.
    r = pallas_attention(q, k, v, scale=scale)               # (B, H, Nq, D)

    # merge heads '(b h) n d -> b n (h d)'
    r2 = jnp.transpose(r, (0, 2, 1, 3)).reshape(B, Nq, inner_dim)

    # to_out: Linear(inner_dim, query_dim) with bias; Dropout(p=0.0) = identity.
    out = pallas_linear(r2.reshape(B * Nq, inner_dim), params["wo"], params["bo"])
    return out.reshape(B, Nq, -1)


def init_params(key, query_dim, context_dim, heads, dim_head, dtype=jnp.float32):
    inner_dim = heads * dim_head
    k1, k2, k3, k4 = jax.random.split(key, 4)
    # Weights stored as (in, out) so kernels compute x @ W directly
    # (equivalent to torch's x @ W.T with W of shape (out, in)).
    wq = jax.random.normal(k1, (query_dim, inner_dim), dtype) * 0.02
    wk = jax.random.normal(k2, (context_dim, inner_dim), dtype) * 0.02
    wv = jax.random.normal(k3, (context_dim, inner_dim), dtype) * 0.02
    params = {
        "heads": heads,
        "dim_head": dim_head,
        "wq": wq,
        "wk": wk,
        "wv": wv,
        "w_kv": jnp.concatenate([wk, wv], axis=1),
        "wo": jax.random.normal(k4, (inner_dim, query_dim), dtype) * 0.02,
        "bo": jnp.zeros((query_dim,), dtype),
    }
    if context_dim == query_dim:
        params["w_qkv"] = jnp.concatenate([wq, wk, wv], axis=1)
    return params


if __name__ == "__main__":
    B, N, query_dim = 2, 256, 64
    heads, dim_head = 4, 32            # inner_dim = 128
    dtype = jnp.float32

    key = jax.random.PRNGKey(0)
    kx, kp = jax.random.split(key)
    x = jax.random.normal(kx, (B, N, query_dim), dtype)
    params = init_params(kp, query_dim, query_dim, heads, dim_head, dtype)

    # Self-attention path (context=None -> context = x); mask unused in reference.
    out = cross_attention_forward(params, x, context=None)
    out = jax.block_until_ready(out)

    assert out.shape == (B, N, query_dim), out.shape
    assert out.dtype == dtype

    # Pure-JAX reference of the exact module math (k scaled, plain softmax).
    def ref(params, x):
        inner = heads * dim_head
        hp = "highest"
        q = jnp.matmul(x, params["wq"], precision=hp)
        k = jnp.matmul(x, params["wk"], precision=hp) * (dim_head ** -0.5)
        v = jnp.matmul(x, params["wv"], precision=hp)

        def sh(t):
            return t.reshape(B, N, heads, dim_head).transpose(0, 2, 1, 3).reshape(
                B * heads, N, dim_head)

        q, k, v = sh(q), sh(k), sh(v)
        s = jnp.einsum("bid,bjd->bij", q, k, precision=hp)
        p = jax.nn.softmax(s, axis=-1)
        r = jnp.einsum("bij,bjd->bid", p, v, precision=hp)
        r = r.reshape(B, heads, N, dim_head).transpose(0, 2, 1, 3).reshape(B, N, inner)
        return jnp.matmul(r, params["wo"], precision=hp) + params["bo"]

    ref_out = ref(params, x)
    err = float(jnp.max(jnp.abs(out - ref_out)))
    assert jnp.allclose(out, ref_out, atol=5e-4, rtol=5e-3), err

    print("KERNEL_OK")
</pallas_src>

<mosaic_0001>
module attributes {stable_mosaic.version = 11 : i64} {
  func.func @_matmul_kernel(%arg0: i32, %arg1: i32, %arg2: i32, %arg3: memref<256x64xf32, #tpu.memory_space<vmem>>, %arg4: memref<64x384xf32, #tpu.memory_space<vmem>>, %arg5: memref<256x384xf32, #tpu.memory_space<vmem>>, %arg6: memref<256x384xf32, #tpu.memory_space<vmem>>) attributes {dimension_semantics = [#tpu.dimension_semantics<parallel>, #tpu.dimension_semantics<parallel>, #tpu.dimension_semantics<arbitrary>], iteration_bounds = array<i64: 2, 1, 1>, scalar_prefetch = 0 : i64, scratch_operands = 1 : i64, tpu.core_type = #tpu.core_type<tc>, window_params = [{transform_indices = @transform_0, window_bounds = array<i64: 256, 64>}, {transform_indices = @transform_1, window_bounds = array<i64: 64, 384>}, {transform_indices = @transform_2, window_bounds = array<i64: 256, 384>}]} {
    %c0_i32 = arith.constant 0 : i32
    %0 = arith.cmpi eq, %arg2, %c0_i32 : i32
    %1 = arith.extui %0 : i1 to i32
    %c0_i32_0 = arith.constant 0 : i32
    %2 = arith.cmpi ne, %1, %c0_i32_0 : i32
    scf.if %2 {
      %cst_10 = arith.constant 0.000000e+00 : f32
      %12 = vector.broadcast %cst_10 : f32 to vector<256x384xf32>
      %c0_11 = arith.constant 0 : index
      %c0_12 = arith.constant 0 : index
      %13 = vector.load %arg6[%c0_11, %c0_12] : memref<256x384xf32, #tpu.memory_space<vmem>>, vector<256x384xf32>
      tpu.vector_store %arg6[%c0_11, %c0_12], %12 {strides = array<i32>} : memref<256x384xf32, #tpu.memory_space<vmem>>, vector<256x384xf32>,
    } else {
    }
    %c0 = arith.constant 0 : index
    %c0_1 = arith.constant 0 : index
    %3 = vector.load %arg6[%c0, %c0_1] : memref<256x384xf32, #tpu.memory_space<vmem>>, vector<256x384xf32>
    %c0_2 = arith.constant 0 : index
    %c0_3 = arith.constant 0 : index
    %4 = vector.load %arg3[%c0_2, %c0_3] : memref<256x64xf32, #tpu.memory_space<vmem>>, vector<256x64xf32>
    %c0_4 = arith.constant 0 : index
    %c0_5 = arith.constant 0 : index
    %5 = vector.load %arg4[%c0_4, %c0_5] : memref<64x384xf32, #tpu.memory_space<vmem>>, vector<64x384xf32>
    %cst = arith.constant dense<0.000000e+00> : vector<256x384xf32>
    %6 = tpu.matmul %4, %5, %cst {dimension_numbers = #tpu.dot_dimension_numbers<[1], [0], [0], [1], [0, 0, 1, 1], [], []>} : vector<256x64xf32>, vector<64x384xf32>, vector<256x384xf32> -> vector<256x384xf32>
    %7 = arith.addf %3, %6 : vector<256x384xf32>
    %c0_6 = arith.constant 0 : index
    %c0_7 = arith.constant 0 : index
    %8 = vector.load %arg6[%c0_6, %c0_7] : memref<256x384xf32, #tpu.memory_space<vmem>>, vector<256x384xf32>
    tpu.vector_store %arg6[%c0_6, %c0_7], %7 {strides = array<i32>} : memref<256x384xf32, #tpu.memory_space<vmem>>, vector<256x384xf32>,
    %c0_i32_8 = arith.constant 0 : i32
    %9 = arith.cmpi eq, %arg2, %c0_i32_8 : i32
    %10 = arith.extui %9 : i1 to i32
    %c0_i32_9 = arith.constant 0 : i32
    %11 = arith.cmpi ne, %10, %c0_i32_9 : i32
    scf.if %11 {
      %c0_10 = arith.constant 0 : index
      %c0_11 = arith.constant 0 : index
      %12 = vector.load %arg6[%c0_10, %c0_11] : memref<256x384xf32, #tpu.memory_space<vmem>>, vector<256x384xf32>
      %c0_12 = arith.constant 0 : index
      %c0_13 = arith.constant 0 : index
      %13 = vector.load %arg5[%c0_12, %c0_13] : memref<256x384xf32, #tpu.memory_space<vmem>>, vector<256x384xf32>
      tpu.vector_store %arg5[%c0_12, %c0_13], %12 {strides = array<i32>} : memref<256x384xf32, #tpu.memory_space<vmem>>, vector<256x384xf32>,
    } else {
    }
    return
  }
  func.func @transform_0(%arg0: i32, %arg1: i32, %arg2: i32) -> (i32, i32) {
    %c0_i32 = arith.constant 0 : i32
    return %arg0, %arg2 : i32, i32
  }
  func.func @transform_1(%arg0: i32, %arg1: i32, %arg2: i32) -> (i32, i32) {
    %c0_i32 = arith.constant 0 : i32
    return %arg2, %arg1 : i32, i32
  }
  func.func @transform_2(%arg0: i32, %arg1: i32, %arg2: i32) -> (i32, i32) {
    %c0_i32 = arith.constant 0 : i32
    return %arg0, %arg1 : i32, i32
  }
}

</mosaic_0001>

<llo_original>
// kernel: tpu_custom_call.1
$region0: #{tpu_custom_call.1}
  #allocation0 [shape = 'u32[]', space=smem, size = 0x4, offset = 0x4, fixed_abs, tag = 'smem constant byte address 0x4 - core index']
  #allocation1 [shape = 'u32[144,128]{1,0:T(1,128)}', space=vmem, size = 0x12000, scoped, tag = 'internal scratch']
  #allocation2 [shape = 'f32[256,384]{1,0:T(8,128)}', space=vmem, size = 0x60000, scoped, tag = 'scratch operand']
  %s0 = inlined_call_operand.vmem [shape: f32[512,64], index: 0, kind: input, shape index: {}]
  %s1 = inlined_call_operand.vmem [shape: f32[64,384], index: 1, kind: input, shape index: {}]
  %s2 = inlined_call_operand.hbm [shape: f32[512,384], index: 2, kind: output, shape index: {}]
  %s3 = sld [smem:[#allocation0]]
  $region49: #{tpu_custom_call.1} parent=0
    _
  %s5 = ssub.s32 1, %s3
  %s6 = scalar_select 0, %s5, %s3
  $region1: #{tpu_custom_call.1} parent=0
    #allocation3 [shape = 'u8[786432]{0}', space=vmem, size = 0xc0000, scoped, tag = 'output window, operand 0']
    #allocation4 [shape = 's32[2]{0}', space=sflag, size = 0x8, scoped, tag = 'scoped memory for tpu_custom_call.1']
    %7 = vsyncpa [#allocation4], 0
    %s8 = scalar_lea.sflag [#allocation4], 1
    %9 = vsyncpa %s8, 0
    loop: start=0, step=1, limit=4
    $region2: #{tpu_custom_call.1} parent=1 // loop_pre_header
      _
    $region3: #{tpu_custom_call.1} parent=1 // loop_header
      %s11 = sphi 0, %s15
      %p12 = scmp.ge.s32.totalorder %s11, 4
      %s18 = sphi 0, %s37
      %s19 = sphi 0, %s33
      %s20 = sphi 0, %s29
      %s21 = sphi 0, %s18
      %s22 = sphi 0, %s19
      %s23 = sphi 0, %s20
      %s24 = sphi 0, %s21
      %s25 = sphi 0, %s22
      %s26 = sphi 0, %s23
      %s42 = sphi 0, %s44
      %s45 = sphi 0, %s42
      %s46 = sphi 0, %s45
      %s62 = sphi 0, %s46
      %s70 = sphi 0, %s72
      %s73 = sphi 0, %s70
      %s74 = sphi 0, %s73
      %s90 = sphi 0, %s74
      %s98 = sphi 0, %s100
      %s101 = sphi 0, %s98
      %s102 = sphi 0, %s101
      %s118 = sphi 0, %s102
    $region4: #{tpu_custom_call.1} parent=1 // loop_header_branch
      %14 = sbr.rel (%p12) target = $region8
    $region5: #{tpu_custom_call.1} parent=1 // loop_body
      %s16 = ssub.s32 %s11, 1
      %s17 = ssub.s32 %s11, 2
      %s27 = sadd.s32 1, %s20
      %p28 = scmp.ge.s32.totalorder %s27, 1
      %s29 = scalar_select %p28, 0, %s27
      %s30 = sadd.s32 1, %s19
      %s31 = scalar_select %p28, %s30, %s19
      %p32 = scmp.ge.s32.totalorder %s31, 1
      %s33 = scalar_select %p32, 0, %s31
      %s34 = sadd.s32 1, %s18
      %s35 = scalar_select %p32, %s34, %s18
      %p36 = scmp.ge.s32.totalorder %s35, 2
      %s37 = scalar_select %p36, 0, %s35
      %s38 = ssub.s32 %s18, %s37
      %s39 = ssub.s32 %s20, %s29
      %s40 = sor.u32 %s38, %s39
      %p41 = scmp.eq.s32.totalorder %s40, 0
      %s43 = sadd.s32 %s42, 1
      %s44 = scalar_select %p41, %s42, %s43
      %p47 = pneg %p41
      %p48 = scmp.eq.s32.totalorder %s11, 1
      %p49 = por %p47, %p48
      %p50 = scmp.ne.s32.totalorder %s42, %s45
      %p51 = scmp.eq.s32.totalorder %s11, 0
      %p52 = por %p50, %p51
      %p53 = scmp.ne.s32.totalorder %s42, %s45
      %p54 = scmp.eq.s32.totalorder %s16, 1
      %p55 = por %p53, %p54
      %p56 = scmp.ne.s32.totalorder %s45, %s46
      %p57 = scmp.eq.s32.totalorder %s16, 0
      %p58 = por %p56, %p57
      %p59 = scmp.ne.s32.totalorder %s45, %s46
      %p60 = scmp.eq.s32.totalorder %s17, 1
      %p61 = por %p59, %p60
      %p63 = scmp.ne.s32.totalorder %s46, %s62
      %p64 = scmp.eq.s32.totalorder %s17, 0
      %p65 = por %p63, %p64
      %s66 = ssub.s32 %s20, %s29
      %s67 = ssub.s32 %s19, %s33
      %s68 = sor.u32 %s66, %s67
      %p69 = scmp.eq.s32.totalorder %s68, 0
      %s71 = sadd.s32 %s70, 1
      %s72 = scalar_select %p69, %s70, %s71
      %p75 = pneg %p69
      %p76 = scmp.eq.s32.totalorder %s11, 1
      %p77 = por %p75, %p76
      %p78 = scmp.ne.s32.totalorder %s70, %s73
      %p79 = scmp.eq.s32.totalorder %s11, 0
      %p80 = por %p78, %p79
      %p81 = scmp.ne.s32.totalorder %s70, %s73
      %p82 = scmp.eq.s32.totalorder %s16, 1
      %p83 = por %p81, %p82
      %p84 = scmp.ne.s32.totalorder %s73, %s74
      %p85 = scmp.eq.s32.totalorder %s16, 0
      %p86 = por %p84, %p85
      %p87 = scmp.ne.s32.totalorder %s73, %s74
      %p88 = scmp.eq.s32.totalorder %s17, 1
      %p89 = por %p87, %p88
      %p91 = scmp.ne.s32.totalorder %s74, %s90
      %p92 = scmp.eq.s32.totalorder %s17, 0
      %p93 = por %p91, %p92
      %s94 = ssub.s32 %s18, %s37
      %s95 = ssub.s32 %s19, %s33
      %s96 = sor.u32 %s94, %s95
      %p97 = scmp.eq.s32.totalorder %s96, 0
      %s99 = sadd.s32 %s98, 1
      %s100 = scalar_select %p97, %s98, %s99
      %p103 = pneg %p97
      %p104 = scmp.eq.s32.totalorder %s11, 1
      %p105 = por %p103, %p104
      %p106 = scmp.ne.s32.totalorder %s98, %s101
      %p107 = scmp.eq.s32.totalorder %s11, 0
      %p108 = por %p106, %p107
      %p109 = scmp.ne.s32.totalorder %s98, %s101
      %p110 = scmp.eq.s32.totalorder %s16, 1
      %p111 = por %p109, %p110
      %p112 = scmp.ne.s32.totalorder %s101, %s102
      %p113 = scmp.eq.s32.totalorder %s16, 0
      %p114 = por %p112, %p113
      %p115 = scmp.ne.s32.totalorder %s101, %s102
      %p116 = scmp.eq.s32.totalorder %s17, 1
      %p117 = por %p115, %p116
      %p119 = scmp.ne.s32.totalorder %s102, %s118
      %p120 = scmp.eq.s32.totalorder %s17, 0
      %p121 = por %p119, %p120
      %p122 = scmp.le.s32.totalorder 1, %s11
      %p123 = scmp.lt.s32.totalorder %s11, 3
      %p124 = pnand %p122, %p123
      %p125 = pneg %p124
      // Predicated region
      $region9: #{tpu_custom_call.1} parent=5 // pred_check
        _
      $region10: #{tpu_custom_call.1} parent=5 // pred_check_branch
        %127 = sbr.rel (%p124) target = $region12
      $region11: #{tpu_custom_call.1} parent=5 // pred_region
        %s128 = ssub.s32 %s11, 1
        // Predicated region
        $region13: #{tpu_custom_call.1} parent=11 // pred_check
          %p129 = pneg %p86
        $region14: #{tpu_custom_call.1} parent=11 // pred_check_branch
          %131 = sbr.rel (%p129) target = $region16
        $region15: #{tpu_custom_call.1} parent=11 // pred_region
          %s132 = smul.u32 8, %s23
          %s133 = smul.u32 3, %s22
          %p134 = scmp.lt.s32.totalorder %s132, 7
          %s135 = scalar_select %p134, %s132, 7
          %p136 = scmp.lt.s32.totalorder %s133, 2
          %s137 = scalar_select %p136, %s133, 2
          %s138 = smul.addr %s135, 3
          %s139 = sadd.s32 %s137, %s138
          %s140 = smul.addr %s139, 8
          %s141 = scalar_lea.vmem %s1, %s140
          %s142 = smul.u32 8, %s23
          %s143 = smul.u32 3, %s22
        $region16: #{tpu_custom_call.1} parent=11 // pred_fallthru
          _
      $region12: #{tpu_custom_call.1} parent=5 // pred_fallthru
        _
      %p144 = scmp.lt.s32.totalorder %s11, 2
      // Predicated region
      $region17: #{tpu_custom_call.1} parent=5 // pred_check
        %p145 = pneg %p144
      $region18: #{tpu_custom_call.1} parent=5 // pred_check_branch
        %147 = sbr.rel (%p145) target = $region20
      $region19: #{tpu_custom_call.1} parent=5 // pred_region
        // Predicated region
        $region21: #{tpu_custom_call.1} parent=19 // pred_check
          %p148 = pneg %p52
        $region22: #{tpu_custom_call.1} parent=19 // pred_check_branch
          %150 = sbr.rel (%p148) target = $region24
        $region23: #{tpu_custom_call.1} parent=19 // pred_region
          %s151 = smul.u32 32, %s18
          %p152 = scmp.lt.s32.totalorder %s151, 63
          %s153 = scalar_select %p152, %s151, 63
          %p154 = scmp.lt.s32.totalorder %s20, 0
          %s155 = scalar_select %p154, %s20, 0
          %s156 = sadd.s32 %s155, %s153
          %s157 = smul.addr %s156, 8
          %s158 = scalar_lea.vmem %s0, %s157
          %s159 = smul.u32 32, %s18
        $region24: #{tpu_custom_call.1} parent=19 // pred_fallthru
          _
      $region20: #{tpu_custom_call.1} parent=5 // pred_fallthru
        _
      %p160 = scmp.le.s32.totalorder 1, %s11
      %p161 = scmp.lt.s32.totalorder %s11, 3
      %p162 = pnand %p160, %p161
      %p163 = pneg %p162
      // Predicated region
      $region25: #{tpu_custom_call.1} parent=5 // pred_check
        _
      $region26: #{tpu_custom_call.1} parent=5 // pred_check_branch
        %165 = sbr.rel (%p162) target = $region28
      $region27: #{tpu_custom_call.1} parent=5 // pred_region
        %s166 = ssub.s32 %s11, 1
        %s167 = smul.u32 32, %s21
        %p168 = scmp.lt.s32.totalorder %s167, 63
        %s169 = scalar_select %p168, %s167, 63
        %p170 = scmp.lt.s32.totalorder %s23, 0
        %s171 = scalar_select %p170, %s23, 0
        %s172 = sadd.s32 %s171, %s169
        %s173 = smul.addr %s172, 8
        %s174 = scalar_lea.vmem %s0, %s173
        %p175 = pneg %p58
        %p176 = pneg %p55
        %s177 = smul.u32 8, %s23
        %s178 = smul.u32 3, %s22
        %p179 = scmp.lt.s32.totalorder %s177, 7
        %s180 = scalar_select %p179, %s177, 7
        %p181 = scmp.lt.s32.totalorder %s178, 2
        %s182 = scalar_select %p181, %s178, 2
        %s183 = smul.addr %s180, 3
        %s184 = sadd.s32 %s182, %s183
        %s185 = smul.addr %s184, 8
        %s186 = scalar_lea.vmem %s1, %s185
        %p187 = pneg %p86
        %p188 = pneg %p83
        %p189 = pneg %p114
        %p190 = pneg %p111
        %s191 = sand.u32 %s101, 1
        %s192 = scalar_lea.sflag [#allocation4], %s191
        %s193 = sand.u32 %s101, 1
        %s194 = smul.addr %s193, 768
        %s195 = scalar_lea.vmem [#allocation3], %s194
        %s196 = smul.u32 32, %s21
        %p197 = scmp.lt.s32.totalorder %s196, 63
        %s198 = scalar_select %p197, %s196, 63
        %p199 = scmp.lt.s32.totalorder %s23, 0
        %s200 = scalar_select %p199, %s23, 0
        %s201 = sadd.s32 %s200, %s198
        %s202 = smul.addr %s201, 8
        %s203 = scalar_lea.vmem %s0, %s202
        %s204 = smul.u32 32, %s21
        %s205 = smul.u32 8, %s23
        %s206 = smul.u32 3, %s22
        %p207 = scmp.lt.s32.totalorder %s205, 7
        %s208 = scalar_select %p207, %s205, 7
        %p209 = scmp.lt.s32.totalorder %s206, 2
        %s210 = scalar_select %p209, %s206, 2
        %s211 = smul.addr %s208, 3
        %s212 = sadd.s32 %s210, %s211
        %s213 = smul.addr %s212, 8
        %s214 = scalar_lea.vmem %s1, %s213
        %s215 = smul.u32 8, %s23
        %s216 = smul.u32 3, %s22
        %s217 = smul.u32 32, %s21
        %s218 = smul.u32 3, %s22
        %p219 = scmp.eq.s32.totalorder %s23, 0
        // Predicated region
        $region29: #{tpu_custom_call.1} parent=27 // pred_check
          %p220 = pneg %p219
        $region30: #{tpu_custom_call.1} parent=27 // pred_check_branch
          %222 = sbr.rel (%p220) target = $region32
        $region31: #{tpu_custom_call.1} parent=27 // pred_region
          %223 = vst [vmem:[#allocation2] sm:$0xff] 0.0
          %224 = vst [vmem:[#allocation2 + $0x8] sm:$0xff] 0.0
          %225 = vst [vmem:[#allocation2 + $0x10] sm:$0xff] 0.0
          %226 = vst [vmem:[#allocation2 + $0x18] sm:$0xff] 0.0
          %227 = vst [vmem:[#allocation2 + $0x20] sm:$0xff] 0.0
          %228 = vst [vmem:[#allocation2 + $0x28] sm:$0xff] 0.0
          %229 = vst [vmem:[#allocation2 + $0x30] sm:$0xff] 0.0
          %230 = vst [vmem:[#allocation2 + $0x38] sm:$0xff] 0.0
          %231 = vst [vmem:[#allocation2 + $0x40] sm:$0xff] 0.0
          %232 = vst [vmem:[#allocation2 + $0x48] sm:$0xff] 0.0
          %233 = vst [vmem:[#allocation2 + $0x50] sm:$0xff] 0.0
          %234 = vst [vmem:[#allocation2 + $0x58] sm:$0xff] 0.0
          %235 = vst [vmem:[#allocation2 + $0x60] sm:$0xff] 0.0
          %236 = vst [vmem:[#allocation2 + $0x68] sm:$0xff] 0.0
          %237 = vst [vmem:[#allocation2 + $0x70] sm:$0xff] 0.0
          %238 = vst [vmem:[#allocation2 + $0x78] sm:$0xff] 0.0
          %239 = vst [vmem:[#allocation2 + $0x80] sm:$0xff] 0.0
          %240 = vst [vmem:[#allocation2 + $0x88] sm:$0xff] 0.0
          %241 = vst [vmem:[#allocation2 + $0x90] sm:$0xff] 0.0
          %242 = vst [vmem:[#allocation2 + $0x98] sm:$0xff] 0.0
          %243 = vst [vmem:[#allocation2 + $0xa0] sm:$0xff] 0.0
          %244 = vst [vmem:[#allocation2 + $0xa8] sm:$0xff] 0.0
          %245 = vst [vmem:[#allocation2 + $0xb0] sm:$0xff] 0.0
          %246 = vst [vmem:[#allocation2 + $0xb8] sm:$0xff] 0.0
          %247 = vst [vmem:[#allocation2 + $0xc0] sm:$0xff] 0.0
          %248 = vst [vmem:[#allocation2 + $0xc8] sm:$0xff] 0.0
          %249 = vst [vmem:[#allocation2 + $0xd0] sm:$0xff] 0.0
          %250 = vst [vmem:[#allocation2 + $0xd8] sm:$0xff] 0.0
          %251 = vst [vmem:[#allocation2 + $0xe0] sm:$0xff] 0.0
          %252 = vst [vmem:[#allocation2 + $0xe8] sm:$0xff] 0.0
          %253 = vst [vmem:[#allocation2 + $0xf0] sm:$0xff] 0.0
          %254 = vst [vmem:[#allocation2 + $0xf8] sm:$0xff] 0.0
          %255 = vst [vmem:[#allocation2 + $0x100] sm:$0xff] 0.0
          %256 = vst [vmem:[#allocation2 + $0x108] sm:$0xff] 0.0
          %257 = vst [vmem:[#allocation2 + $0x110] sm:$0xff] 0.0
          %258 = vst [vmem:[#allocation2 + $0x118] sm:$0xff] 0.0
          %259 = vst [vmem:[#allocation2 + $0x120] sm:$0xff] 0.0
          %260 = vst [vmem:[#allocation2 + $0x128] sm:$0xff] 0.0
          %261 = vst [vmem:[#allocation2 + $0x130] sm:$0xff] 0.0
          %262 = vst [vmem:[#allocation2 + $0x138] sm:$0xff] 0.0
          %263 = vst [vmem:[#allocation2 + $0x140] sm:$0xff] 0.0
          %264 = vst [vmem:[#allocation2 + $0x148] sm:$0xff] 0.0
          %265 = vst [vmem:[#allocation2 + $0x150] sm:$0xff] 0.0
          %266 = vst [vmem:[#allocation2 + $0x158] sm:$0xff] 0.0
          %267 = vst [vmem:[#allocation2 + $0x160] sm:$0xff] 0.0
          %268 = vst [vmem:[#allocation2 + $0x168] sm:$0xff] 0.0
          %269 = vst [vmem:[#allocation2 + $0x170] sm:$0xff] 0.0
          %270 = vst [vmem:[#allocation2 + $0x178] sm:$0xff] 0.0
          %271 = vst [vmem:[#allocation2 + $0x180] sm:$0xff] 0.0
          %272 = vst [vmem:[#allocation2 + $0x188] sm:$0xff] 0.0
          %273 = vst [vmem:[#allocation2 + $0x190] sm:$0xff] 0.0
          %274 = vst [vmem:[#allocation2 + $0x198] sm:$0xff] 0.0
          %275 = vst [vmem:[#allocation2 + $0x1a0] sm:$0xff] 0.0
          %276 = vst [vmem:[#allocation2 + $0x1a8] sm:$0xff] 0.0
          %277 = vst [vmem:[#allocation2 + $0x1b0] sm:$0xff] 0.0
          %278 = vst [vmem:[#allocation2 + $0x1b8] sm:$0xff] 0.0
          %279 = vst [vmem:[#allocation2 + $0x1c0] sm:$0xff] 0.0
          %280 = vst [vmem:[#allocation2 + $0x1c8] sm:$0xff] 0.0
          %281 = vst [vmem:[#allocation2 + $0x1d0] sm:$0xff] 0.0
          %282 = vst [vmem:[#allocation2 + $0x1d8] sm:$0xff] 0.0
          %283 = vst [vmem:[#allocation2 + $0x1e0] sm:$0xff] 0.0
          %284 = vst [vmem:[#allocation2 + $0x1e8] sm:$0xff] 0.0
          %285 = vst [vmem:[#allocation2 + $0x1f0] sm:$0xff] 0.0
          %286 = vst [vmem:[#allocation2 + $0x1f8] sm:$0xff] 0.0
          %287 = vst [vmem:[#allocation2 + $0x200] sm:$0xff] 0.0
          %288 = vst [vmem:[#allocation2 + $0x208] sm:$0xff] 0.0
          %289 = vst [vmem:[#allocation2 + $0x210] sm:$0xff] 0.0
          %290 = vst [vmem:[#allocation2 + $0x218] sm:$0xff] 0.0
          %291 = vst [vmem:[#allocation2 + $0x220] sm:$0xff] 0.0
          %292 = vst [vmem:[#allocation2 + $0x228] sm:$0xff] 0.0
          %293 = vst [vmem:[#allocation2 + $0x230] sm:$0xff] 0.0
          %294 = vst [vmem:[#allocation2 + $0x238] sm:$0xff] 0.0
          %295 = vst [vmem:[#allocation2 + $0x240] sm:$0xff] 0.0
          %296 = vst [vmem:[#allocation2 + $0x248] sm:$0xff] 0.0
          %297 = vst [vmem:[#allocation2 + $0x250] sm:$0xff] 0.0
          %298 = vst [vmem:[#allocation2 + $0x258] sm:$0xff] 0.0
          %299 = vst [vmem:[#allocation2 + $0x260] sm:$0xff] 0.0
          %300 = vst [vmem:[#allocation2 + $0x268] sm:$0xff] 0.0
          %301 = vst [vmem:[#allocation2 + $0x270] sm:$0xff] 0.0
          %302 = vst [vmem:[#allocation2 + $0x278] sm:$0xff] 0.0
          %303 = vst [vmem:[#allocation2 + $0x280] sm:$0xff] 0.0
          %304 = vst [vmem:[#allocation2 + $0x288] sm:$0xff] 0.0
          %305 = vst [vmem:[#allocation2 + $0x290] sm:$0xff] 0.0
          %306 = vst [vmem:[#allocation2 + $0x298] sm:$0xff] 0.0
          %307 = vst [vmem:[#allocation2 + $0x2a0] sm:$0xff] 0.0
          %308 = vst [vmem:[#allocation2 + $0x2a8] sm:$0xff] 0.0
          %309 = vst [vmem:[#allocation2 + $0x2b0] sm:$0xff] 0.0
          %310 = vst [vmem:[#allocation2 + $0x2b8] sm:$0xff] 0.0
          %311 = vst [vmem:[#allocation2 + $0x2c0] sm:$0xff] 0.0
          %312 = vst [vmem:[#allocation2 + $0x2c8] sm:$0xff] 0.0
          %313 = vst [vmem:[#allocation2 + $0x2d0] sm:$0xff] 0.0
          %314 = vst [vmem:[#allocation2 + $0x2d8] sm:$0xff] 0.0
          %315 = vst [vmem:[#allocation2 + $0x2e0] sm:$0xff] 0.0
          %316 = vst [vmem:[#allocation2 + $0x2e8] sm:$0xff] 0.0
          %317 = vst [vmem:[#allocation2 + $0x2f0] sm:$0xff] 0.0
          %318 = vst [vmem:[#allocation2 + $0x2f8] sm:$0xff] 0.0
        $region32: #{tpu_custom_call.1} parent=27 // pred_fallthru
          _
        %v319 = vld [vmem:[#allocation2] sm:$0xff]
        %v320 = vld [vmem:[#allocation2 + $0x8] sm:$0xff]
        %v321 = vld [vmem:[#allocation2 + $0x10] sm:$0xff]
        %v322 = vld [vmem:[#allocation2 + $0x18] sm:$0xff]
        %v323 = vld [vmem:[#allocation2 + $0x20] sm:$0xff]
        %v324 = vld [vmem:[#allocation2 + $0x28] sm:$0xff]
        %v325 = vld [vmem:[#allocation2 + $0x30] sm:$0xff]
        %v326 = vld [vmem:[#allocation2 + $0x38] sm:$0xff]
        %v327 = vld [vmem:[#allocation2 + $0x40] sm:$0xff]
        %v328 = vld [vmem:[#allocation2 + $0x48] sm:$0xff]
        %v329 = vld [vmem:[#allocation2 + $0x50] sm:$0xff]
        %v330 = vld [vmem:[#allocation2 + $0x58] sm:$0xff]
        %v331 = vld [vmem:[#allocation2 + $0x60] sm:$0xff]
        %v332 = vld [vmem:[#allocation2 + $0x68] sm:$0xff]
        %v333 = vld [vmem:[#allocation2 + $0x70] sm:$0xff]
        %v334 = vld [vmem:[#allocation2 + $0x78] sm:$0xff]
        %v335 = vld [vmem:[#allocation2 + $0x80] sm:$0xff]
        %v336 = vld [vmem:[#allocation2 + $0x88] sm:$0xff]
        %v337 = vld [vmem:[#allocation2 + $0x90] sm:$0xff]
        %v338 = vld [vmem:[#allocation2 + $0x98] sm:$0xff]
        %v339 = vld [vmem:[#allocation2 + $0xa0] sm:$0xff]
        %v340 = vld [vmem:[#allocation2 + $0xa8] sm:$0xff]
        %v341 = vld [vmem:[#allocation2 + $0xb0] sm:$0xff]
        %v342 = vld [vmem:[#allocation2 + $0xb8] sm:$0xff]
        %v343 = vld [vmem:[#allocation2 + $0xc0] sm:$0xff]
        %v344 = vld [vmem:[#allocation2 + $0xc8] sm:$0xff]
        %v345 = vld [vmem:[#allocation2 + $0xd0] sm:$0xff]
        %v346 = vld [vmem:[#allocation2 + $0xd8] sm:$0xff]
        %v347 = vld [vmem:[#allocation2 + $0xe0] sm:$0xff]
        %v348 = vld [vmem:[#allocation2 + $0xe8] sm:$0xff]
        %v349 = vld [vmem:[#allocation2 + $0xf0] sm:$0xff]
        %v350 = vld [vmem:[#allocation2 + $0xf8] sm:$0xff]
        %v351 = vld [vmem:[#allocation2 + $0x100] sm:$0xff]
        %v352 = vld [vmem:[#allocation2 + $0x108] sm:$0xff]
        %v353 = vld [vmem:[#allocation2 + $0x110] sm:$0xff]
        %v354 = vld [vmem:[#allocation2 + $0x118] sm:$0xff]
        %v355 = vld [vmem:[#allocation2 + $0x120] sm:$0xff]
        %v356 = vld [vmem:[#allocation2 + $0x128] sm:$0xff]
        %v357 = vld [vmem:[#allocation2 + $0x130] sm:$0xff]
        %v358 = vld [vmem:[#allocation2 + $0x138] sm:$0xff]
        %v359 = vld [vmem:[#allocation2 + $0x140] sm:$0xff]
        %v360 = vld [vmem:[#allocation2 + $0x148] sm:$0xff]
        %v361 = vld [vmem:[#allocation2 + $0x150] sm:$0xff]
        %v362 = vld [vmem:[#allocation2 + $0x158] sm:$0xff]
        %v363 = vld [vmem:[#allocation2 + $0x160] sm:$0xff]
        %v364 = vld [vmem:[#allocation2 + $0x168] sm:$0xff]
        %v365 = vld [vmem:[#allocation2 + $0x170] sm:$0xff]
        %v366 = vld [vmem:[#allocation2 + $0x178] sm:$0xff]
        %v367 = vld [vmem:[#allocation2 + $0x180] sm:$0xff]
        %v368 = vld [vmem:[#allocation2 + $0x188] sm:$0xff]
        %v369 = vld [vmem:[#allocation2 + $0x190] sm:$0xff]
        %v370 = vld [vmem:[#allocation2 + $0x198] sm:$0xff]
        %v371 = vld [vmem:[#allocation2 + $0x1a0] sm:$0xff]
        %v372 = vld [vmem:[#allocation2 + $0x1a8] sm:$0xff]
        %v373 = vld [vmem:[#allocation2 + $0x1b0] sm:$0xff]
        %v374 = vld [vmem:[#allocation2 + $0x1b8] sm:$0xff]
        %v375 = vld [vmem:[#allocation2 + $0x1c0] sm:$0xff]
        %v376 = vld [vmem:[#allocation2 + $0x1c8] sm:$0xff]
        %v377 = vld [vmem:[#allocation2 + $0x1d0] sm:$0xff]
        %v378 = vld [vmem:[#allocation2 + $0x1d8] sm:$0xff]
        %v379 = vld [vmem:[#allocation2 + $0x1e0] sm:$0xff]
        %v380 = vld [vmem:[#allocation2 + $0x1e8] sm:$0xff]
        %v381 = vld [vmem:[#allocation2 + $0x1f0] sm:$0xff]
        %v382 = vld [vmem:[#allocation2 + $0x1f8] sm:$0xff]
        %v383 = vld [vmem:[#allocation2 + $0x200] sm:$0xff]
        %v384 = vld [vmem:[#allocation2 + $0x208] sm:$0xff]
        %v385 = vld [vmem:[#allocation2 + $0x210] sm:$0xff]
        %v386 = vld [vmem:[#allocation2 + $0x218] sm:$0xff]
        %v387 = vld [vmem:[#allocation2 + $0x220] sm:$0xff]
        %v388 = vld [vmem:[#allocation2 + $0x228] sm:$0xff]
        %v389 = vld [vmem:[#allocation2 + $0x230] sm:$0xff]
        %v390 = vld [vmem:[#allocation2 + $0x238] sm:$0xff]
        %v391 = vld [vmem:[#allocation2 + $0x240] sm:$0xff]
        %v392 = vld [vmem:[#allocation2 + $0x248] sm:$0xff]
        %v393 = vld [vmem:[#allocation2 + $0x250] sm:$0xff]
        %v394 = vld [vmem:[#allocation2 + $0x258] sm:$0xff]
        %v395 = vld [vmem:[#allocation2 + $0x260] sm:$0xff]
        %v396 = vld [vmem:[#allocation2 + $0x268] sm:$0xff]
        %v397 = vld [vmem:[#allocation2 + $0x270] sm:$0xff]
        %v398 = vld [vmem:[#allocation2 + $0x278] sm:$0xff]
        %v399 = vld [vmem:[#allocation2 + $0x280] sm:$0xff]
        %v400 = vld [vmem:[#allocation2 + $0x288] sm:$0xff]
        %v401 = vld [vmem:[#allocation2 + $0x290] sm:$0xff]
        %v402 = vld [vmem:[#allocation2 + $0x298] sm:$0xff]
        %v403 = vld [vmem:[#allocation2 + $0x2a0] sm:$0xff]
        %v404 = vld [vmem:[#allocation2 + $0x2a8] sm:$0xff]
        %v405 = vld [vmem:[#allocation2 + $0x2b0] sm:$0xff]
        %v406 = vld [vmem:[#allocation2 + $0x2b8] sm:$0xff]
        %v407 = vld [vmem:[#allocation2 + $0x2c0] sm:$0xff]
        %v408 = vld [vmem:[#allocation2 + $0x2c8] sm:$0xff]
        %v409 = vld [vmem:[#allocation2 + $0x2d0] sm:$0xff]
        %v410 = vld [vmem:[#allocation2 + $0x2d8] sm:$0xff]
        %v411 = vld [vmem:[#allocation2 + $0x2e0] sm:$0xff]
        %v412 = vld [vmem:[#allocation2 + $0x2e8] sm:$0xff]
        %v413 = vld [vmem:[#allocation2 + $0x2f0] sm:$0xff]
        %v414 = vld [vmem:[#allocation2 + $0x2f8] sm:$0xff]
        %v415 = vld [vmem:[%s203] sm:$0xff]
        %v416 = vld [vmem:[%s203 + $0x8] sm:$0xff]
        %v417 = vld [vmem:[%s203 + $0x10] sm:$0xff]
        %v418 = vld [vmem:[%s203 + $0x18] sm:$0xff]
        %v419 = vld [vmem:[%s203 + $0x20] sm:$0xff]
        %v420 = vld [vmem:[%s203 + $0x28] sm:$0xff]
        %v421 = vld [vmem:[%s203 + $0x30] sm:$0xff]
        %v422 = vld [vmem:[%s203 + $0x38] sm:$0xff]
        %v423 = vld [vmem:[%s203 + $0x40] sm:$0xff]
        %v424 = vld [vmem:[%s203 + $0x48] sm:$0xff]
        %v425 = vld [vmem:[%s203 + $0x50] sm:$0xff]
        %v426 = vld [vmem:[%s203 + $0x58] sm:$0xff]
        %v427 = vld [vmem:[%s203 + $0x60] sm:$0xff]
        %v428 = vld [vmem:[%s203 + $0x68] sm:$0xff]
        %v429 = vld [vmem:[%s203 + $0x70] sm:$0xff]
        %v430 = vld [vmem:[%s203 + $0x78] sm:$0xff]
        %v431 = vld [vmem:[%s203 + $0x80] sm:$0xff]
        %v432 = vld [vmem:[%s203 + $0x88] sm:$0xff]
        %v433 = vld [vmem:[%s203 + $0x90] sm:$0xff]
        %v434 = vld [vmem:[%s203 + $0x98] sm:$0xff]
        %v435 = vld [vmem:[%s203 + $0xa0] sm:$0xff]
        %v436 = vld [vmem:[%s203 + $0xa8] sm:$0xff]
        %v437 = vld [vmem:[%s203 + $0xb0] sm:$0xff]
        %v438 = vld [vmem:[%s203 + $0xb8] sm:$0xff]
        %v439 = vld [vmem:[%s203 + $0xc0] sm:$0xff]
        %v440 = vld [vmem:[%s203 + $0xc8] sm:$0xff]
        %v441 = vld [vmem:[%s203 + $0xd0] sm:$0xff]
        %v442 = vld [vmem:[%s203 + $0xd8] sm:$0xff]
        %v443 = vld [vmem:[%s203 + $0xe0] sm:$0xff]
        %v444 = vld [vmem:[%s203 + $0xe8] sm:$0xff]
        %v445 = vld [vmem:[%s203 + $0xf0] sm:$0xff]
        %v446 = vld [vmem:[%s203 + $0xf8] sm:$0xff]
        %v447 = vld [vmem:[%s214] sm:$0xff]
        %v448 = vld [vmem:[%s214 + $0x8] sm:$0xff]
        %v449 = vld [vmem:[%s214 + $0x10] sm:$0xff]
        %v450 = vld [vmem:[%s214 + $0x18] sm:$0xff]
        %v451 = vld [vmem:[%s214 + $0x20] sm:$0xff]
        %v452 = vld [vmem:[%s214 + $0x28] sm:$0xff]
        %v453 = vld [vmem:[%s214 + $0x30] sm:$0xff]
        %v454 = vld [vmem:[%s214 + $0x38] sm:$0xff]
        %v455 = vld [vmem:[%s214 + $0x40] sm:$0xff]
        %v456 = vld [vmem:[%s214 + $0x48] sm:$0xff]
        %v457 = vld [vmem:[%s214 + $0x50] sm:$0xff]
        %v458 = vld [vmem:[%s214 + $0x58] sm:$0xff]
        %v459 = vld [vmem:[%s214 + $0x60] sm:$0xff]
        %v460 = vld [vmem:[%s214 + $0x68] sm:$0xff]
        %v461 = vld [vmem:[%s214 + $0x70] sm:$0xff]
        %v462 = vld [vmem:[%s214 + $0x78] sm:$0xff]
        %v463 = vld [vmem:[%s214 + $0x80] sm:$0xff]
        %v464 = vld [vmem:[%s214 + $0x88] sm:$0xff]
        %v465 = vld [vmem:[%s214 + $0x90] sm:$0xff]
        %v466 = vld [vmem:[%s214 + $0x98] sm:$0xff]
        %v467 = vld [vmem:[%s214 + $0xa0] sm:$0xff]
        %v468 = vld [vmem:[%s214 + $0xa8] sm:$0xff]
        %v469 = vld [vmem:[%s214 + $0xb0] sm:$0xff]
        %v470 = vld [vmem:[%s214 + $0xb8] sm:$0xff]
        %vm471 = vcmask 523264
        %v473 = vsel %vm471, %v415, 0
        %v476 = vsel %vm471, %v416, 0
        %v479 = vsel %vm471, %v417, 0
        %v482 = vsel %vm471, %v418, 0
        %v485 = vsel %vm471, %v419, 0
        %v488 = vsel %vm471, %v420, 0
        %v491 = vsel %vm471, %v421, 0
        %v494 = vsel %vm471, %v422, 0
        %v497 = vsel %vm471, %v423, 0
        %v500 = vsel %vm471, %v424, 0
        %v503 = vsel %vm471, %v425, 0
        %v506 = vsel %vm471, %v426, 0
        %v509 = vsel %vm471, %v427, 0
        %v512 = vsel %vm471, %v428, 0
        %v515 = vsel %vm471, %v429, 0
        %v518 = vsel %vm471, %v430, 0
        %v521 = vsel %vm471, %v431, 0
        %v524 = vsel %vm471, %v432, 0
        %v527 = vsel %vm471, %v433, 0
        %v530 = vsel %vm471, %v434, 0
        %v533 = vsel %vm471, %v435, 0
        %v536 = vsel %vm471, %v436, 0
        %v539 = vsel %vm471, %v437, 0
        %v542 = vsel %vm471, %v438, 0
        %v545 = vsel %vm471, %v439, 0
        %v548 = vsel %vm471, %v440, 0
        %v551 = vsel %vm471, %v441, 0
        %v554 = vsel %vm471, %v442, 0
        %v557 = vsel %vm471, %v443, 0
        %v560 = vsel %vm471, %v444, 0
        %v563 = vsel %vm471, %v445, 0
        %v566 = vsel %vm471, %v446, 0
        %568 = vmatprep.subr.mxu0 %v448
        %569 = vmatpush1.msra.mxu0 %v447
        %570 = vmatprep.subr.mxu0 %v451
        %571 = vmatpush1.msra.mxu0 %v450
        %572 = vmatprep.subr.mxu0 %v454
        %573 = vmatpush1.msra.mxu0 %v453
        %574 = vmatprep.subr.mxu0 %v457
        %575 = vmatpush1.msra.mxu0 %v456
        %576 = vmatprep.subr.mxu0 %v460
        %577 = vmatpush1.msra.mxu0 %v459
        %578 = vmatprep.subr.mxu0 %v463
        %579 = vmatpush1.msra.mxu0 %v462
        %580 = vmatprep.subr.mxu0 %v466
        %581 = vmatpush1.msra.mxu0 %v465
        %582 = vmatprep.subr.mxu0 %v469
        %583 = vmatpush1.msra.mxu0 %v468
        %584 = vmatprep.subr.mxu0 0.0
        %585 = vmatpush1.msra.mxu0 0.0
        %586 = vmatprep.subr.mxu0 0.0
        %587 = vmatpush1.msra.mxu0 0.0
        %588 = vmatprep.subr.mxu0 0.0
        %589 = vmatpush1.msra.mxu0 0.0
        %590 = vmatprep.subr.mxu0 0.0
        %591 = vmatpush1.msra.mxu0 0.0
        %592 = vmatprep.subr.mxu0 0.0
        %593 = vmatpush1.msra.mxu0 0.0
        %594 = vmatprep.subr.mxu0 0.0
        %595 = vmatpush1.msra.mxu0 0.0
        %596 = vmatprep.subr.mxu0 0.0
        %597 = vmatpush1.msra.mxu0 0.0
        %598 = vmatprep.subr.mxu0 0.0
        %599 = vmatpush1.msra.mxu0 0.0
        %600 = vmatprep.subr.mxu0 0.0
        %601 = vmatpush1.msra.mxu0 0.0
        %602 = vmatprep.subr.mxu0 0.0
        %603 = vmatpush1.msra.mxu0 0.0
        %604 = vmatprep.subr.mxu0 0.0
        %605 = vmatpush1.msra.mxu0 0.0
        %606 = vmatprep.subr.mxu0 0.0
        %607 = vmatpush1.msra.mxu0 0.0
        %608 = vmatprep.subr.mxu0 0.0
        %609 = vmatpush1.msra.mxu0 0.0
        %610 = vmatprep.subr.mxu0 0.0
        %611 = vmatpush1.msra.mxu0 0.0
        %612 = vmatprep.subr.mxu0 0.0
        %613 = vmatpush1.msra.mxu0 0.0
        %614 = vmatprep.subr.mxu0 0.0
        %615 = vmatpush1.msra.mxu0 0.0
        %616 = vmatprep.subr.mxu0 0.0
        %617 = vmatpush1.msra.mxu0 0.0
        %618 = vmatprep.subr.mxu0 0.0
        %619 = vmatpush1.msra.mxu0 0.0
        %620 = vmatprep.subr.mxu0 0.0
        %621 = vmatpush1.msra.mxu0 0.0
        %622 = vmatprep.subr.mxu0 0.0
        %623 = vmatpush1.msra.mxu0 0.0
        %624 = vmatprep.subr.mxu0 0.0
        %625 = vmatpush1.msra.mxu0 0.0
        %626 = vmatprep.subr.mxu0 0.0
        %627 = vmatpush1.msra.mxu0 0.0
        %628 = vmatprep.subr.mxu0 0.0
        %629 = vmatpush1.msra.mxu0 0.0
        %630 = vmatprep.subr.mxu0 0.0
        %631 = vmatpush1.msra.mxu0 0.0
        %632 = vmatprep.mubr.f32.mxu0 0.0
        %633 = vmatmul.mubr.f32.gmra.mrb[0].mxu0 %v473
        %v634 = vpop.f32.mrb[0].mxu0
        %v635 = vadd.f32 0.0, %v634
        %v636 = vpop.f32.mrb[0].mxu0
        %v637 = vadd.f32 0.0, %v636
        %638 = vmatprep.mubr.f32.mxu0 0.0
        %639 = vmatmul.mubr.f32.gmra.mrb[0].mxu0 %v476
        %v640 = vpop.f32.mrb[0].mxu0
        %v641 = vadd.f32 0.0, %v640
        %v642 = vpop.f32.mrb[0].mxu0
        %v643 = vadd.f32 0.0, %v642
        %644 = vmatprep.mubr.f32.mxu0 0.0
        %645 = vmatmul.mubr.f32.gmra.mrb[0].mxu0 %v479
        %v646 = vpop.f32.mrb[0].mxu0
        %v647 = vadd.f32 0.0, %v646
        %v648 = vpop.f32.mrb[0].mxu0
        %v649 = vadd.f32 0.0, %v648
        %650 = vmatprep.mubr.f32.mxu0 0.0
        %651 = vmatmul.mubr.f32.gmra.mrb[0].mxu0 %v482
        %v652 = vpop.f32.mrb[0].mxu0
        %v653 = vadd.f32 0.0, %v652
        %v654 = vpop.f32.mrb[0].mxu0
        %v655 = vadd.f32 0.0, %v654
        %656 = vmatprep.mubr.f32.mxu0 0.0
        %657 = vmatmul.mubr.f32.gmra.mrb[0].mxu0 %v485
        %v658 = vpop.f32.mrb[0].mxu0
        %v659 = vadd.f32 0.0, %v658
        %v660 = vpop.f32.mrb[0].mxu0
        %v661 = vadd.f32 0.0, %v660
        %662 = vmatprep.mubr.f32.mxu0 0.0
        %663 = vmatmul.mubr.f32.gmra.mrb[0].mxu0 %v488
        %v664 = vpop.f32.mrb[0].mxu0
        %v665 = vadd.f32 0.0, %v664
        %v666 = vpop.f32.mrb[0].mxu0
        %v667 = vadd.f32 0.0, %v666
        %668 = vmatprep.mubr.f32.mxu0 0.0
        %669 = vmatmul.mubr.f32.gmra.mrb[0].mxu0 %v491
        %v670 = vpop.f32.mrb[0].mxu0
        %v671 = vadd.f32 0.0, %v670
        %v672 = vpop.f32.mrb[0].mxu0
        %v673 = vadd.f32 0.0, %v672
        %674 = vmatprep.mubr.f32.mxu0 0.0
        %675 = vmatmul.mubr.f32.gmra.mrb[0].mxu0 %v494
        %v676 = vpop.f32.mrb[0].mxu0
        %v677 = vadd.f32 0.0, %v676
        %v678 = vpop.f32.mrb[0].mxu0
        %v679 = vadd.f32 0.0, %v678
        %680 = vmatprep.mubr.f32.mxu0 0.0
        %681 = vmatmul.mubr.f32.gmra.mrb[0].mxu0 %v497
        %v682 = vpop.f32.mrb[0].mxu0
        %v683 = vadd.f32 0.0, %v682
        %v684 = vpop.f32.mrb[0].mxu0
        %v685 = vadd.f32 0.0, %v684
        %686 = vmatprep.mubr.f32.mxu0 0.0
        %687 = vmatmul.mubr.f32.gmra.mrb[0].mxu0 %v500
        %v688 = vpop.f32.mrb[0].mxu0
        %v689 = vadd.f32 0.0, %v688
        %v690 = vpop.f32.mrb[0].mxu0
        %v691 = vadd.f32 0.0, %v690
        %692 = vmatprep.mubr.f32.mxu0 0.0
        %693 = vmatmul.mubr.f32.gmra.mrb[0].mxu0 %v503
        %v694 = vpop.f32.mrb[0].mxu0
        %v695 = vadd.f32 0.0, %v694
        %v696 = vpop.f32.mrb[0].mxu0
        %v697 = vadd.f32 0.0, %v696
        %698 = vmatprep.mubr.f32.mxu0 0.0
        %699 = vmatmul.mubr.f32.gmra.mrb[0].mxu0 %v506
        %v700 = vpop.f32.mrb[0].mxu0
        %v701 = vadd.f32 0.0, %v700
        %v702 = vpop.f32.mrb[0].mxu0
        %v703 = vadd.f32 0.0, %v702
        %704 = vmatprep.mubr.f32.mxu0 0.0
        %705 = vmatmul.mubr.f32.gmra.mrb[0].mxu0 %v509
        %v706 = vpop.f32.mrb[0].mxu0
        %v707 = vadd.f32 0.0, %v706
        %v708 = vpop.f32.mrb[0].mxu0
        %v709 = vadd.f32 0.0, %v708
        %710 = vmatprep.mubr.f32.mxu0 0.0
        %711 = vmatmul.mubr.f32.gmra.mrb[0].mxu0 %v512
        %v712 = vpop.f32.mrb[0].mxu0
        %v713 = vadd.f32 0.0, %v712
        %v714 = vpop.f32.mrb[0].mxu0
        %v715 = vadd.f32 0.0, %v714
        %716 = vmatprep.mubr.f32.mxu0 0.0
        %717 = vmatmul.mubr.f32.gmra.mrb[0].mxu0 %v515
        %v718 = vpop.f32.mrb[0].mxu0
        %v719 = vadd.f32 0.0, %v718
        %v720 = vpop.f32.mrb[0].mxu0
        %v721 = vadd.f32 0.0, %v720
        %722 = vmatprep.mubr.f32.mxu0 0.0
        %723 = vmatmul.mubr.f32.gmra.mrb[0].mxu0 %v518
        %v724 = vpop.f32.mrb[0].mxu0
        %v725 = vadd.f32 0.0, %v724
        %v726 = vpop.f32.mrb[0].mxu0
        %v727 = vadd.f32 0.0, %v726
        %728 = vmatprep.mubr.f32.mxu0 0.0
        %729 = vmatmul.mubr.f32.gmra.mrb[0].mxu0 %v521
        %v730 = vpop.f32.mrb[0].mxu0
        %v731 = vadd.f32 0.0, %v730
        %v732 = vpop.f32.mrb[0].mxu0
        %v733 = vadd.f32 0.0, %v732
        %734 = vmatprep.mubr.f32.mxu0 0.0
        %735 = vmatmul.mubr.f32.gmra.mrb[0].mxu0 %v524
        %v736 = vpop.f32.mrb[0].mxu0
        %v737 = vadd.f32 0.0, %v736
        %v738 = vpop.f32.mrb[0].mxu0
        %v739 = vadd.f32 0.0, %v738
        %740 = vmatprep.mubr.f32.mxu0 0.0
        %741 = vmatmul.mubr.f32.gmra.mrb[0].mxu0 %v527
        %v742 = vpop.f32.mrb[0].mxu0
        %v743 = vadd.f32 0.0, %v742
        %v744 = vpop.f32.mrb[0].mxu0
        %v745 = vadd.f32 0.0, %v744
        %746 = vmatprep.mubr.f32.mxu0 0.0
        %747 = vmatmul.mubr.f32.gmra.mrb[0].mxu0 %v530
        %v748 = vpop.f32.mrb[0].mxu0
        %v749 = vadd.f32 0.0, %v748
        %v750 = vpop.f32.mrb[0].mxu0
        %v751 = vadd.f32 0.0, %v750
        %752 = vmatprep.mubr.f32.mxu0 0.0
        %753 = vmatmul.mubr.f32.gmra.mrb[0].mxu0 %v533
        %v754 = vpop.f32.mrb[0].mxu0
        %v755 = vadd.f32 0.0, %v754
        %v756 = vpop.f32.mrb[0].mxu0
        %v757 = vadd.f32 0.0, %v756
        %758 = vmatprep.mubr.f32.mxu0 0.0
        %759 = vmatmul.mubr.f32.gmra.mrb[0].mxu0 %v536
        %v760 = vpop.f32.mrb[0].mxu0
        %v761 = vadd.f32 0.0, %v760
        %v762 = vpop.f32.mrb[0].mxu0
        %v763 = vadd.f32 0.0, %v762
        %764 = vmatprep.mubr.f32.mxu0 0.0
        %765 = vmatmul.mubr.f32.gmra.mrb[0].mxu0 %v539
        %v766 = vpop.f32.mrb[0].mxu0
        %v767 = vadd.f32 0.0, %v766
        %v768 = vpop.f32.mrb[0].mxu0
        %v769 = vadd.f32 0.0, %v768
        %770 = vmatprep.mubr.f32.mxu0 0.0
        %771 = vmatmul.mubr.f32.gmra.mrb[0].mxu0 %v542
        %v772 = vpop.f32.mrb[0].mxu0
        %v773 = vadd.f32 0.0, %v772
        %v774 = vpop.f32.mrb[0].mxu0
        %v775 = vadd.f32 0.0, %v774
        %776 = vmatprep.mubr.f32.mxu0 0.0
        %777 = vmatmul.mubr.f32.gmra.mrb[0].mxu0 %v545
        %v778 = vpop.f32.mrb[0].mxu0
        %v779 = vadd.f32 0.0, %v778
        %v780 = vpop.f32.mrb[0].mxu0
        %v781 = vadd.f32 0.0, %v780
        %782 = vmatprep.mubr.f32.mxu0 0.0
        %783 = vmatmul.mubr.f32.gmra.mrb[0].mxu0 %v548
        %v784 = vpop.f32.mrb[0].mxu0
        %v785 = vadd.f32 0.0, %v784
        %v786 = vpop.f32.mrb[0].mxu0
        %v787 = vadd.f32 0.0, %v786
        %788 = vmatprep.mubr.f32.mxu0 0.0
        %789 = vmatmul.mubr.f32.gmra.mrb[0].mxu0 %v551
        %v790 = vpop.f32.mrb[0].mxu0
        %v791 = vadd.f32 0.0, %v790
        %v792 = vpop.f32.mrb[0].mxu0
        %v793 = vadd.f32 0.0, %v792
        %794 = vmatprep.mubr.f32.mxu0 0.0
        %795 = vmatmul.mubr.f32.gmra.mrb[0].mxu0 %v554
        %v796 = vpop.f32.mrb[0].mxu0
        %v797 = vadd.f32 0.0, %v796
        %v798 = vpop.f32.mrb[0].mxu0
        %v799 = vadd.f32 0.0, %v798
        %800 = vmatprep.mubr.f32.mxu0 0.0
        %801 = vmatmul.mubr.f32.gmra.mrb[0].mxu0 %v557
        %v802 = vpop.f32.mrb[0].mxu0
        %v803 = vadd.f32 0.0, %v802
        %v804 = vpop.f32.mrb[0].mxu0
        %v805 = vadd.f32 0.0, %v804
        %806 = vmatprep.mubr.f32.mxu0 0.0
        %807 = vmatmul.mubr.f32.gmra.mrb[0].mxu0 %v560
        %v808 = vpop.f32.mrb[0].mxu0
        %v809 = vadd.f32 0.0, %v808
        %v810 = vpop.f32.mrb[0].mxu0
        %v811 = vadd.f32 0.0, %v810
        %812 = vmatprep.mubr.f32.mxu0 0.0
        %813 = vmatmul.mubr.f32.gmra.mrb[0].mxu0 %v563
        %v814 = vpop.f32.mrb[0].mxu0
        %v815 = vadd.f32 0.0, %v814
        %v816 = vpop.f32.mrb[0].mxu0
        %v817 = vadd.f32 0.0, %v816
        %818 = vmatprep.mubr.f32.mxu0 0.0
        %819 = vmatmul.mubr.f32.gmra.mrb[0].mxu0 %v566
        %v820 = vpop.f32.mrb[0].mxu0
        %v821 = vadd.f32 0.0, %v820
        %v822 = vpop.f32.mrb[0].mxu0
        %v823 = vadd.f32 0.0, %v822
        %824 = vdwg.mxu0
        %825 = vmatprep.subr.mxu0 0.0
        %826 = vmatpush1.msra.mxu0 %v449
        %827 = vmatprep.subr.mxu0 0.0
        %828 = vmatpush1.msra.mxu0 %v452
        %829 = vmatprep.subr.mxu0 0.0
        %830 = vmatpush1.msra.mxu0 %v455
        %831 = vmatprep.subr.mxu0 0.0
        %832 = vmatpush1.msra.mxu0 %v458
        %833 = vmatprep.subr.mxu0 0.0
        %834 = vmatpush1.msra.mxu0 %v461
        %835 = vmatprep.subr.mxu0 0.0
        %836 = vmatpush1.msra.mxu0 %v464
        %837 = vmatprep.subr.mxu0 0.0
        %838 = vmatpush1.msra.mxu0 %v467
        %839 = vmatprep.subr.mxu0 0.0
        %840 = vmatpush1.msra.mxu0 %v470
        %841 = vmatprep.subr.mxu0 0.0
        %842 = vmatpush1.msra.mxu0 0.0
        %843 = vmatprep.subr.mxu0 0.0
        %844 = vmatpush1.msra.mxu0 0.0
        %845 = vmatprep.subr.mxu0 0.0
        %846 = vmatpush1.msra.mxu0 0.0
        %847 = vmatprep.subr.mxu0 0.0
        %848 = vmatpush1.msra.mxu0 0.0
        %849 = vmatprep.subr.mxu0 0.0
        %850 = vmatpush1.msra.mxu0 0.0
        %851 = vmatprep.subr.mxu0 0.0
        %852 = vmatpush1.msra.mxu0 0.0
        %853 = vmatprep.subr.mxu0 0.0
        %854 = vmatpush1.msra.mxu0 0.0
        %855 = vmatprep.subr.mxu0 0.0
        %856 = vmatpush1.msra.mxu0 0.0
        %857 = vmatprep.subr.mxu0 0.0
        %858 = vmatpush1.msra.mxu0 0.0
        %859 = vmatprep.subr.mxu0 0.0
        %860 = vmatpush1.msra.mxu0 0.0
        %861 = vmatprep.subr.mxu0 0.0
        %862 = vmatpush1.msra.mxu0 0.0
        %863 = vmatprep.subr.mxu0 0.0
        %864 = vmatpush1.msra.mxu0 0.0
        %865 = vmatprep.subr.mxu0 0.0
        %866 = vmatpush1.msra.mxu0 0.0
        %867 = vmatprep.subr.mxu0 0.0
        %868 = vmatpush1.msra.mxu0 0.0
        %869 = vmatprep.subr.mxu0 0.0
        %870 = vmatpush1.msra.mxu0 0.0
        %871 = vmatprep.subr.mxu0 0.0
        %872 = vmatpush1.msra.mxu0 0.0
        %873 = vmatprep.subr.mxu0 0.0
        %874 = vmatpush1.msra.mxu0 0.0
        %875 = vmatprep.subr.mxu0 0.0
        %876 = vmatpush1.msra.mxu0 0.0
        %877 = vmatprep.subr.mxu0 0.0
        %878 = vmatpush1.msra.mxu0 0.0
        %879 = vmatprep.subr.mxu0 0.0
        %880 = vmatpush1.msra.mxu0 0.0
        %881 = vmatprep.subr.mxu0 0.0
        %882 = vmatpush1.msra.mxu0 0.0
        %883 = vmatprep.subr.mxu0 0.0
        %884 = vmatpush1.msra.mxu0 0.0
        %885 = vmatprep.subr.mxu0 0.0
        %886 = vmatpush1.msra.mxu0 0.0
        %887 = vmatprep.subr.mxu0 0.0
        %888 = vmatpush1.msra.mxu0 0.0
        %889 = vmatprep.mubr.f32.mxu0 0.0
        %890 = vmatmul.mubr.f32.gmra.mrb[0].mxu0 %v473
        %v891 = vpop.f32.mrb[0].mxu0
        %v892 = vadd.f32 0.0, %v891
        %v893 = vpop.f32.mrb[0].mxu0
        %894 = vmatprep.mubr.f32.mxu0 0.0
        %895 = vmatmul.mubr.f32.gmra.mrb[0].mxu0 %v476
        %v896 = vpop.f32.mrb[0].mxu0
        %v897 = vadd.f32 0.0, %v896
        %v898 = vpop.f32.mrb[0].mxu0
        %899 = vmatprep.mubr.f32.mxu0 0.0
        %900 = vmatmul.mubr.f32.gmra.mrb[0].mxu0 %v479
        %v901 = vpop.f32.mrb[0].mxu0
        %v902 = vadd.f32 0.0, %v901
        %v903 = vpop.f32.mrb[0].mxu0
        %904 = vmatprep.mubr.f32.mxu0 0.0
        %905 = vmatmul.mubr.f32.gmra.mrb[0].mxu0 %v482
        %v906 = vpop.f32.mrb[0].mxu0
        %v907 = vadd.f32 0.0, %v906
        %v908 = vpop.f32.mrb[0].mxu0
        %909 = vmatprep.mubr.f32.mxu0 0.0
        %910 = vmatmul.mubr.f32.gmra.mrb[0].mxu0 %v485
        %v911 = vpop.f32.mrb[0].mxu0
        %v912 = vadd.f32 0.0, %v911
        %v913 = vpop.f32.mrb[0].mxu0
        %914 = vmatprep.mubr.f32.mxu0 0.0
        %915 = vmatmul.mubr.f32.gmra.mrb[0].mxu0 %v488
        %v916 = vpop.f32.mrb[0].mxu0
        %v917 = vadd.f32 0.0, %v916
        %v918 = vpop.f32.mrb[0].mxu0
        %919 = vmatprep.mubr.f32.mxu0 0.0
        %920 = vmatmul.mubr.f32.gmra.mrb[0].mxu0 %v491
        %v921 = vpop.f32.mrb[0].mxu0
        %v922 = vadd.f32 0.0, %v921
        %v923 = vpop.f32.mrb[0].mxu0
        %924 = vmatprep.mubr.f32.mxu0 0.0
        %925 = vmatmul.mubr.f32.gmra.mrb[0].mxu0 %v494
        %v926 = vpop.f32.mrb[0].mxu0
        %v927 = vadd.f32 0.0, %v926
        %v928 = vpop.f32.mrb[0].mxu0
        %929 = vmatprep.mubr.f32.mxu0 0.0
        %930 = vmatmul.mubr.f32.gmra.mrb[0].mxu0 %v497
        %v931 = vpop.f32.mrb[0].mxu0
        %v932 = vadd.f32 0.0, %v931
        %v933 = vpop.f32.mrb[0].mxu0
        %934 = vmatprep.mubr.f32.mxu0 0.0
        %935 = vmatmul.mubr.f32.gmra.mrb[0].mxu0 %v500
        %v936 = vpop.f32.mrb[0].mxu0
        %v937 = vadd.f32 0.0, %v936
        %v938 = vpop.f32.mrb[0].mxu0
        %939 = vmatprep.mubr.f32.mxu0 0.0
        %940 = vmatmul.mubr.f32.gmra.mrb[0].mxu0 %v503
        %v941 = vpop.f32.mrb[0].mxu0
        %v942 = vadd.f32 0.0, %v941
        %v943 = vpop.f32.mrb[0].mxu0
        %944 = vmatprep.mubr.f32.mxu0 0.0
        %945 = vmatmul.mubr.f32.gmra.mrb[0].mxu0 %v506
        %v946 = vpop.f32.mrb[0].mxu0
        %v947 = vadd.f32 0.0, %v946
        %v948 = vpop.f32.mrb[0].mxu0
        %949 = vmatprep.mubr.f32.mxu0 0.0
        %950 = vmatmul.mubr.f32.gmra.mrb[0].mxu0 %v509
        %v951 = vpop.f32.mrb[0].mxu0
        %v952 = vadd.f32 0.0, %v951
        %v953 = vpop.f32.mrb[0].mxu0
        %954 = vmatprep.mubr.f32.mxu0 0.0
        %955 = vmatmul.mubr.f32.gmra.mrb[0].mxu0 %v512
        %v956 = vpop.f32.mrb[0].mxu0
        %v957 = vadd.f32 0.0, %v956
        %v958 = vpop.f32.mrb[0].mxu0
        %959 = vmatprep.mubr.f32.mxu0 0.0
        %960 = vmatmul.mubr.f32.gmra.mrb[0].mxu0 %v515
        %v961 = vpop.f32.mrb[0].mxu0
        %v962 = vadd.f32 0.0, %v961
        %v963 = vpop.f32.mrb[0].mxu0
        %964 = vmatprep.mubr.f32.mxu0 0.0
        %965 = vmatmul.mubr.f32.gmra.mrb[0].mxu0 %v518
        %v966 = vpop.f32.mrb[0].mxu0
        %v967 = vadd.f32 0.0, %v966
        %v968 = vpop.f32.mrb[0].mxu0
        %969 = vmatprep.mubr.f32.mxu0 0.0
        %970 = vmatmul.mubr.f32.gmra.mrb[0].mxu0 %v521
        %v971 = vpop.f32.mrb[0].mxu0
        %v972 = vadd.f32 0.0, %v971
        %v973 = vpop.f32.mrb[0].mxu0
        %974 = vmatprep.mubr.f32.mxu0 0.0
        %975 = vmatmul.mubr.f32.gmra.mrb[0].mxu0 %v524
        %v976 = vpop.f32.mrb[0].mxu0
        %v977 = vadd.f32 0.0, %v976
        %v978 = vpop.f32.mrb[0].mxu0
        %979 = vmatprep.mubr.f32.mxu0 0.0
        %980 = vmatmul.mubr.f32.gmra.mrb[0].mxu0 %v527
        %v981 = vpop.f32.mrb[0].mxu0
        %v982 = vadd.f32 0.0, %v981
        %v983 = vpop.f32.mrb[0].mxu0
        %984 = vmatprep.mubr.f32.mxu0 0.0
        %985 = vmatmul.mubr.f32.gmra.mrb[0].mxu0 %v530
        %v986 = vpop.f32.mrb[0].mxu0
        %v987 = vadd.f32 0.0, %v986
        %v988 = vpop.f32.mrb[0].mxu0
        %989 = vmatprep.mubr.f32.mxu0 0.0
        %990 = vmatmul.mubr.f32.gmra.mrb[0].mxu0 %v533
        %v991 = vpop.f32.mrb[0].mxu0
        %v992 = vadd.f32 0.0, %v991
        %v993 = vpop.f32.mrb[0].mxu0
        %994 = vmatprep.mubr.f32.mxu0 0.0
        %995 = vmatmul.mubr.f32.gmra.mrb[0].mxu0 %v536
        %v996 = vpop.f32.mrb[0].mxu0
        %v997 = vadd.f32 0.0, %v996
        %v998 = vpop.f32.mrb[0].mxu0
        %999 = vmatprep.mubr.f32.mxu0 0.0
        %1000 = vmatmul.mubr.f32.gmra.mrb[0].mxu0 %v539
        %v1001 = vpop.f32.mrb[0].mxu0
        %v1002 = vadd.f32 0.0, %v1001
        %v1003 = vpop.f32.mrb[0].mxu0
        %1004 = vmatprep.mubr.f32.mxu0 0.0
        %1005 = vmatmul.mubr.f32.gmra.mrb[0].mxu0 %v542
        %v1006 = vpop.f32.mrb[0].mxu0
        %v1007 = vadd.f32 0.0, %v1006
        %v1008 = vpop.f32.mrb[0].mxu0
        %1009 = vmatprep.mubr.f32.mxu0 0.0
        %1010 = vmatmul.mubr.f32.gmra.mrb[0].mxu0 %v545
        %v1011 = vpop.f32.mrb[0].mxu0
        %v1012 = vadd.f32 0.0, %v1011
        %v1013 = vpop.f32.mrb[0].mxu0
        %1014 = vmatprep.mubr.f32.mxu0 0.0
        %1015 = vmatmul.mubr.f32.gmra.mrb[0].mxu0 %v548
        %v1016 = vpop.f32.mrb[0].mxu0
        %v1017 = vadd.f32 0.0, %v1016
        %v1018 = vpop.f32.mrb[0].mxu0
        %1019 = vmatprep.mubr.f32.mxu0 0.0
        %1020 = vmatmul.mubr.f32.gmra.mrb[0].mxu0 %v551
        %v1021 = vpop.f32.mrb[0].mxu0
        %v1022 = vadd.f32 0.0, %v1021
        %v1023 = vpop.f32.mrb[0].mxu0
        %1024 = vmatprep.mubr.f32.mxu0 0.0
        %1025 = vmatmul.mubr.f32.gmra.mrb[0].mxu0 %v554
        %v1026 = vpop.f32.mrb[0].mxu0
        %v1027 = vadd.f32 0.0, %v1026
        %v1028 = vpop.f32.mrb[0].mxu0
        %1029 = vmatprep.mubr.f32.mxu0 0.0
        %1030 = vmatmul.mubr.f32.gmra.mrb[0].mxu0 %v557
        %v1031 = vpop.f32.mrb[0].mxu0
        %v1032 = vadd.f32 0.0, %v1031
        %v1033 = vpop.f32.mrb[0].mxu0
        %1034 = vmatprep.mubr.f32.mxu0 0.0
        %1035 = vmatmul.mubr.f32.gmra.mrb[0].mxu0 %v560
        %v1036 = vpop.f32.mrb[0].mxu0
        %v1037 = vadd.f32 0.0, %v1036
        %v1038 = vpop.f32.mrb[0].mxu0
        %1039 = vmatprep.mubr.f32.mxu0 0.0
        %1040 = vmatmul.mubr.f32.gmra.mrb[0].mxu0 %v563
        %v1041 = vpop.f32.mrb[0].mxu0
        %v1042 = vadd.f32 0.0, %v1041
        %v1043 = vpop.f32.mrb[0].mxu0
        %1044 = vmatprep.mubr.f32.mxu0 0.0
        %1045 = vmatmul.mubr.f32.gmra.mrb[0].mxu0 %v566
        %v1046 = vpop.f32.mrb[0].mxu0
        %v1047 = vadd.f32 0.0, %v1046
        %v1048 = vpop.f32.mrb[0].mxu0
        %1049 = vdwg.mxu0
        %v1050 = vadd.f32 %v319, %v635
        %v1051 = vadd.f32 %v320, %v637
        %v1052 = vadd.f32 %v321, %v892
        %v1053 = vadd.f32 %v322, %v641
        %v1054 = vadd.f32 %v323, %v643
        %v1055 = vadd.f32 %v324, %v897
        %v1056 = vadd.f32 %v325, %v647
        %v1057 = vadd.f32 %v326, %v649
        %v1058 = vadd.f32 %v327, %v902
        %v1059 = vadd.f32 %v328, %v653
        %v1060 = vadd.f32 %v329, %v655
        %v1061 = vadd.f32 %v330, %v907
        %v1062 = vadd.f32 %v331, %v659
        %v1063 = vadd.f32 %v332, %v661
        %v1064 = vadd.f32 %v333, %v912
        %v1065 = vadd.f32 %v334, %v665
        %v1066 = vadd.f32 %v335, %v667
        %v1067 = vadd.f32 %v336, %v917
        %v1068 = vadd.f32 %v337, %v671
        %v1069 = vadd.f32 %v338, %v673
        %v1070 = vadd.f32 %v339, %v922
        %v1071 = vadd.f32 %v340, %v677
        %v1072 = vadd.f32 %v341, %v679
        %v1073 = vadd.f32 %v342, %v927
        %v1074 = vadd.f32 %v343, %v683
        %v1075 = vadd.f32 %v344, %v685
        %v1076 = vadd.f32 %v345, %v932
        %v1077 = vadd.f32 %v346, %v689
        %v1078 = vadd.f32 %v347, %v691
        %v1079 = vadd.f32 %v348, %v937
        %v1080 = vadd.f32 %v349, %v695
        %v1081 = vadd.f32 %v350, %v697
        %v1082 = vadd.f32 %v351, %v942
        %v1083 = vadd.f32 %v352, %v701
        %v1084 = vadd.f32 %v353, %v703
        %v1085 = vadd.f32 %v354, %v947
        %v1086 = vadd.f32 %v355, %v707
        %v1087 = vadd.f32 %v356, %v709
        %v1088 = vadd.f32 %v357, %v952
        %v1089 = vadd.f32 %v358, %v713
        %v1090 = vadd.f32 %v359, %v715
        %v1091 = vadd.f32 %v360, %v957
        %v1092 = vadd.f32 %v361, %v719
        %v1093 = vadd.f32 %v362, %v721
        %v1094 = vadd.f32 %v363, %v962
        %v1095 = vadd.f32 %v364, %v725
        %v1096 = vadd.f32 %v365, %v727
        %v1097 = vadd.f32 %v366, %v967
        %v1098 = vadd.f32 %v367, %v731
        %v1099 = vadd.f32 %v368, %v733
        %v1100 = vadd.f32 %v369, %v972
        %v1101 = vadd.f32 %v370, %v737
        %v1102 = vadd.f32 %v371, %v739
        %v1103 = vadd.f32 %v372, %v977
        %v1104 = vadd.f32 %v373, %v743
        %v1105 = vadd.f32 %v374, %v745
        %v1106 = vadd.f32 %v375, %v982
        %v1107 = vadd.f32 %v376, %v749
        %v1108 = vadd.f32 %v377, %v751
        %v1109 = vadd.f32 %v378, %v987
        %v1110 = vadd.f32 %v379, %v755
        %v1111 = vadd.f32 %v380, %v757
        %v1112 = vadd.f32 %v381, %v992
        %v1113 = vadd.f32 %v382, %v761
        %v1114 = vadd.f32 %v383, %v763
        %v1115 = vadd.f32 %v384, %v997
        %v1116 = vadd.f32 %v385, %v767
        %v1117 = vadd.f32 %v386, %v769
        %v1118 = vadd.f32 %v387, %v1002
        %v1119 = vadd.f32 %v388, %v773
        %v1120 = vadd.f32 %v389, %v775
        %v1121 = vadd.f32 %v390, %v1007
        %v1122 = vadd.f32 %v391, %v779
        %v1123 = vadd.f32 %v392, %v781
        %v1124 = vadd.f32 %v393, %v1012
        %v1125 = vadd.f32 %v394, %v785
        %v1126 = vadd.f32 %v395, %v787
        %v1127 = vadd.f32 %v396, %v1017
        %v1128 = vadd.f32 %v397, %v791
        %v1129 = vadd.f32 %v398, %v793
        %v1130 = vadd.f32 %v399, %v1022
        %v1131 = vadd.f32 %v400, %v797
        %v1132 = vadd.f32 %v401, %v799
        %v1133 = vadd.f32 %v402, %v1027
        %v1134 = vadd.f32 %v403, %v803
        %v1135 = vadd.f32 %v404, %v805
        %v1136 = vadd.f32 %v405, %v1032
        %v1137 = vadd.f32 %v406, %v809
        %v1138 = vadd.f32 %v407, %v811
        %v1139 = vadd.f32 %v408, %v1037
        %v1140 = vadd.f32 %v409, %v815
        %v1141 = vadd.f32 %v410, %v817
        %v1142 = vadd.f32 %v411, %v1042
        %v1143 = vadd.f32 %v412, %v821
        %v1144 = vadd.f32 %v413, %v823
        %v1145 = vadd.f32 %v414, %v1047
        %1146 = vst [vmem:[#allocation2] sm:$0xff] %v1050
        %1147 = vst [vmem:[#allocation2 + $0x8] sm:$0xff] %v1051
        %1148 = vst [vmem:[#allocation2 + $0x10] sm:$0xff] %v1052
        %1149 = vst [vmem:[#allocation2 + $0x18] sm:$0xff] %v1053
        %1150 = vst [vmem:[#allocation2 + $0x20] sm:$0xff] %v1054
        %1151 = vst [vmem:[#allocation2 + $0x28] sm:$0xff] %v1055
        %1152 = vst [vmem:[#allocation2 + $0x30] sm:$0xff] %v1056
        %1153 = vst [vmem:[#allocation2 + $0x38] sm:$0xff] %v1057
        %1154 = vst [vmem:[#allocation2 + $0x40] sm:$0xff] %v1058
        %1155 = vst [vmem:[#allocation2 + $0x48] sm:$0xff] %v1059
        %1156 = vst [vmem:[#allocation2 + $0x50] sm:$0xff] %v1060
        %1157 = vst [vmem:[#allocation2 + $0x58] sm:$0xff] %v1061
        %1158 = vst [vmem:[#allocation2 + $0x60] sm:$0xff] %v1062
        %1159 = vst [vmem:[#allocation2 + $0x68] sm:$0xff] %v1063
        %1160 = vst [vmem:[#allocation2 + $0x70] sm:$0xff] %v1064
        %1161 = vst [vmem:[#allocation2 + $0x78] sm:$0xff] %v1065
        %1162 = vst [vmem:[#allocation2 + $0x80] sm:$0xff] %v1066
        %1163 = vst [vmem:[#allocation2 + $0x88] sm:$0xff] %v1067
        %1164 = vst [vmem:[#allocation2 + $0x90] sm:$0xff] %v1068
        %1165 = vst [vmem:[#allocation2 + $0x98] sm:$0xff] %v1069
        %1166 = vst [vmem:[#allocation2 + $0xa0] sm:$0xff] %v1070
        %1167 = vst [vmem:[#allocation2 + $0xa8] sm:$0xff] %v1071
        %1168 = vst [vmem:[#allocation2 + $0xb0] sm:$0xff] %v1072
        %1169 = vst [vmem:[#allocation2 + $0xb8] sm:$0xff] %v1073
        %1170 = vst [vmem:[#allocation2 + $0xc0] sm:$0xff] %v1074
        %1171 = vst [vmem:[#allocation2 + $0xc8] sm:$0xff] %v1075
        %1172 = vst [vmem:[#allocation2 + $0xd0] sm:$0xff] %v1076
        %1173 = vst [vmem:[#allocation2 + $0xd8] sm:$0xff] %v1077
        %1174 = vst [vmem:[#allocation2 + $0xe0] sm:$0xff] %v1078
        %1175 = vst [vmem:[#allocation2 + $0xe8] sm:$0xff] %v1079
        %1176 = vst [vmem:[#allocation2 + $0xf0] sm:$0xff] %v1080
        %1177 = vst [vmem:[#allocation2 + $0xf8] sm:$0xff] %v1081
        %1178 = vst [vmem:[#allocation2 + $0x100] sm:$0xff] %v1082
        %1179 = vst [vmem:[#allocation2 + $0x108] sm:$0xff] %v1083
        %1180 = vst [vmem:[#allocation2 + $0x110] sm:$0xff] %v1084
        %1181 = vst [vmem:[#allocation2 + $0x118] sm:$0xff] %v1085
        %1182 = vst [vmem:[#allocation2 + $0x120] sm:$0xff] %v1086
        %1183 = vst [vmem:[#allocation2 + $0x128] sm:$0xff] %v1087
        %1184 = vst [vmem:[#allocation2 + $0x130] sm:$0xff] %v1088
        %1185 = vst [vmem:[#allocation2 + $0x138] sm:$0xff] %v1089
        %1186 = vst [vmem:[#allocation2 + $0x140] sm:$0xff] %v1090
        %1187 = vst [vmem:[#allocation2 + $0x148] sm:$0xff] %v1091
        %1188 = vst [vmem:[#allocation2 + $0x150] sm:$0xff] %v1092
        %1189 = vst [vmem:[#allocation2 + $0x158] sm:$0xff] %v1093
        %1190 = vst [vmem:[#allocation2 + $0x160] sm:$0xff] %v1094
        %1191 = vst [vmem:[#allocation2 + $0x168] sm:$0xff] %v1095
        %1192 = vst [vmem:[#allocation2 + $0x170] sm:$0xff] %v1096
        %1193 = vst [vmem:[#allocation2 + $0x178] sm:$0xff] %v1097
        %1194 = vst [vmem:[#allocation2 + $0x180] sm:$0xff] %v1098
        %1195 = vst [vmem:[#allocation2 + $0x188] sm:$0xff] %v1099
        %1196 = vst [vmem:[#allocation2 + $0x190] sm:$0xff] %v1100
        %1197 = vst [vmem:[#allocation2 + $0x198] sm:$0xff] %v1101
        %1198 = vst [vmem:[#allocation2 + $0x1a0] sm:$0xff] %v1102
        %1199 = vst [vmem:[#allocation2 + $0x1a8] sm:$0xff] %v1103
        %1200 = vst [vmem:[#allocation2 + $0x1b0] sm:$0xff] %v1104
        %1201 = vst [vmem:[#allocation2 + $0x1b8] sm:$0xff] %v1105
        %1202 = vst [vmem:[#allocation2 + $0x1c0] sm:$0xff] %v1106
        %1203 = vst [vmem:[#allocation2 + $0x1c8] sm:$0xff] %v1107
        %1204 = vst [vmem:[#allocation2 + $0x1d0] sm:$0xff] %v1108
        %1205 = vst [vmem:[#allocation2 + $0x1d8] sm:$0xff] %v1109
        %1206 = vst [vmem:[#allocation2 + $0x1e0] sm:$0xff] %v1110
        %1207 = vst [vmem:[#allocation2 + $0x1e8] sm:$0xff] %v1111
        %1208 = vst [vmem:[#allocation2 + $0x1f0] sm:$0xff] %v1112
        %1209 = vst [vmem:[#allocation2 + $0x1f8] sm:$0xff] %v1113
        %1210 = vst [vmem:[#allocation2 + $0x200] sm:$0xff] %v1114
        %1211 = vst [vmem:[#allocation2 + $0x208] sm:$0xff] %v1115
        %1212 = vst [vmem:[#allocation2 + $0x210] sm:$0xff] %v1116
        %1213 = vst [vmem:[#allocation2 + $0x218] sm:$0xff] %v1117
        %1214 = vst [vmem:[#allocation2 + $0x220] sm:$0xff] %v1118
        %1215 = vst [vmem:[#allocation2 + $0x228] sm:$0xff] %v1119
        %1216 = vst [vmem:[#allocation2 + $0x230] sm:$0xff] %v1120
        %1217 = vst [vmem:[#allocation2 + $0x238] sm:$0xff] %v1121
        %1218 = vst [vmem:[#allocation2 + $0x240] sm:$0xff] %v1122
        %1219 = vst [vmem:[#allocation2 + $0x248] sm:$0xff] %v1123
        %1220 = vst [vmem:[#allocation2 + $0x250] sm:$0xff] %v1124
        %1221 = vst [vmem:[#allocation2 + $0x258] sm:$0xff] %v1125
        %1222 = vst [vmem:[#allocation2 + $0x260] sm:$0xff] %v1126
        %1223 = vst [vmem:[#allocation2 + $0x268] sm:$0xff] %v1127
        %1224 = vst [vmem:[#allocation2 + $0x270] sm:$0xff] %v1128
        %1225 = vst [vmem:[#allocation2 + $0x278] sm:$0xff] %v1129
        %1226 = vst [vmem:[#allocation2 + $0x280] sm:$0xff] %v1130
        %1227 = vst [vmem:[#allocation2 + $0x288] sm:$0xff] %v1131
        %1228 = vst [vmem:[#allocation2 + $0x290] sm:$0xff] %v1132
        %1229 = vst [vmem:[#allocation2 + $0x298] sm:$0xff] %v1133
        %1230 = vst [vmem:[#allocation2 + $0x2a0] sm:$0xff] %v1134
        %1231 = vst [vmem:[#allocation2 + $0x2a8] sm:$0xff] %v1135
        %1232 = vst [vmem:[#allocation2 + $0x2b0] sm:$0xff] %v1136
        %1233 = vst [vmem:[#allocation2 + $0x2b8] sm:$0xff] %v1137
        %1234 = vst [vmem:[#allocation2 + $0x2c0] sm:$0xff] %v1138
        %1235 = vst [vmem:[#allocation2 + $0x2c8] sm:$0xff] %v1139
        %1236 = vst [vmem:[#allocation2 + $0x2d0] sm:$0xff] %v1140
        %1237 = vst [vmem:[#allocation2 + $0x2d8] sm:$0xff] %v1141
        %1238 = vst [vmem:[#allocation2 + $0x2e0] sm:$0xff] %v1142
        %1239 = vst [vmem:[#allocation2 + $0x2e8] sm:$0xff] %v1143
        %1240 = vst [vmem:[#allocation2 + $0x2f0] sm:$0xff] %v1144
        %1241 = vst [vmem:[#allocation2 + $0x2f8] sm:$0xff] %v1145
        // Predicated region
        $region33: #{tpu_custom_call.1} parent=27 // pred_check
          %p1242 = pneg %p219
        $region34: #{tpu_custom_call.1} parent=27 // pred_check_branch
          %1244 = sbr.rel (%p1242) target = $region36
        $region35: #{tpu_custom_call.1} parent=27 // pred_region
          %v1245 = vld [vmem:[#allocation2] sm:$0xff]
          %v1246 = vld [vmem:[#allocation2 + $0x8] sm:$0xff]
          %v1247 = vld [vmem:[#allocation2 + $0x10] sm:$0xff]
          %v1248 = vld [vmem:[#allocation2 + $0x18] sm:$0xff]
          %v1249 = vld [vmem:[#allocation2 + $0x20] sm:$0xff]
          %v1250 = vld [vmem:[#allocation2 + $0x28] sm:$0xff]
          %v1251 = vld [vmem:[#allocation2 + $0x30] sm:$0xff]
          %v1252 = vld [vmem:[#allocation2 + $0x38] sm:$0xff]
          %v1253 = vld [vmem:[#allocation2 + $0x40] sm:$0xff]
          %v1254 = vld [vmem:[#allocation2 + $0x48] sm:$0xff]
          %v1255 = vld [vmem:[#allocation2 + $0x50] sm:$0xff]
          %v1256 = vld [vmem:[#allocation2 + $0x58] sm:$0xff]
          %v1257 = vld [vmem:[#allocation2 + $0x60] sm:$0xff]
          %v1258 = vld [vmem:[#allocation2 + $0x68] sm:$0xff]
          %v1259 = vld [vmem:[#allocation2 + $0x70] sm:$0xff]
          %v1260 = vld [vmem:[#allocation2 + $0x78] sm:$0xff]
          %v1261 = vld [vmem:[#allocation2 + $0x80] sm:$0xff]
          %v1262 = vld [vmem:[#allocation2 + $0x88] sm:$0xff]
          %v1263 = vld [vmem:[#allocation2 + $0x90] sm:$0xff]
          %v1264 = vld [vmem:[#allocation2 + $0x98] sm:$0xff]
          %v1265 = vld [vmem:[#allocation2 + $0xa0] sm:$0xff]
          %v1266 = vld [vmem:[#allocation2 + $0xa8] sm:$0xff]
          %v1267 = vld [vmem:[#allocation2 + $0xb0] sm:$0xff]
          %v1268 = vld [vmem:[#allocation2 + $0xb8] sm:$0xff]
          %v1269 = vld [vmem:[#allocation2 + $0xc0] sm:$0xff]
          %v1270 = vld [vmem:[#allocation2 + $0xc8] sm:$0xff]
          %v1271 = vld [vmem:[#allocation2 + $0xd0] sm:$0xff]
          %v1272 = vld [vmem:[#allocation2 + $0xd8] sm:$0xff]
          %v1273 = vld [vmem:[#allocation2 + $0xe0] sm:$0xff]
          %v1274 = vld [vmem:[#allocation2 + $0xe8] sm:$0xff]
          %v1275 = vld [vmem:[#allocation2 + $0xf0] sm:$0xff]
          %v1276 = vld [vmem:[#allocation2 + $0xf8] sm:$0xff]
          %v1277 = vld [vmem:[#allocation2 + $0x100] sm:$0xff]
          %v1278 = vld [vmem:[#allocation2 + $0x108] sm:$0xff]
          %v1279 = vld [vmem:[#allocation2 + $0x110] sm:$0xff]
          %v1280 = vld [vmem:[#allocation2 + $0x118] sm:$0xff]
          %v1281 = vld [vmem:[#allocation2 + $0x120] sm:$0xff]
          %v1282 = vld [vmem:[#allocation2 + $0x128] sm:$0xff]
          %v1283 = vld [vmem:[#allocation2 + $0x130] sm:$0xff]
          %v1284 = vld [vmem:[#allocation2 + $0x138] sm:$0xff]
          %v1285 = vld [vmem:[#allocation2 + $0x140] sm:$0xff]
          %v1286 = vld [vmem:[#allocation2 + $0x148] sm:$0xff]
          %v1287 = vld [vmem:[#allocation2 + $0x150] sm:$0xff]
          %v1288 = vld [vmem:[#allocation2 + $0x158] sm:$0xff]
          %v1289 = vld [vmem:[#allocation2 + $0x160] sm:$0xff]
          %v1290 = vld [vmem:[#allocation2 + $0x168] sm:$0xff]
          %v1291 = vld [vmem:[#allocation2 + $0x170] sm:$0xff]
          %v1292 = vld [vmem:[#allocation2 + $0x178] sm:$0xff]
          %v1293 = vld [vmem:[#allocation2 + $0x180] sm:$0xff]
          %v1294 = vld [vmem:[#allocation2 + $0x188] sm:$0xff]
          %v1295 = vld [vmem:[#allocation2 + $0x190] sm:$0xff]
          %v1296 = vld [vmem:[#allocation2 + $0x198] sm:$0xff]
          %v1297 = vld [vmem:[#allocation2 + $0x1a0] sm:$0xff]
          %v1298 = vld [vmem:[#allocation2 + $0x1a8] sm:$0xff]
          %v1299 = vld [vmem:[#allocation2 + $0x1b0] sm:$0xff]
          %v1300 = vld [vmem:[#allocation2 + $0x1b8] sm:$0xff]
          %v1301 = vld [vmem:[#allocation2 + $0x1c0] sm:$0xff]
          %v1302 = vld [vmem:[#allocation2 + $0x1c8] sm:$0xff]
          %v1303 = vld [vmem:[#allocation2 + $0x1d0] sm:$0xff]
          %v1304 = vld [vmem:[#allocation2 + $0x1d8] sm:$0xff]
          %v1305 = vld [vmem:[#allocation2 + $0x1e0] sm:$0xff]
          %v1306 = vld [vmem:[#allocation2 + $0x1e8] sm:$0xff]
          %v1307 = vld [vmem:[#allocation2 + $0x1f0] sm:$0xff]
          %v1308 = vld [vmem:[#allocation2 + $0x1f8] sm:$0xff]
          %v1309 = vld [vmem:[#allocation2 + $0x200] sm:$0xff]
          %v1310 = vld [vmem:[#allocation2 + $0x208] sm:$0xff]
          %v1311 = vld [vmem:[#allocation2 + $0x210] sm:$0xff]
          %v1312 = vld [vmem:[#allocation2 + $0x218] sm:$0xff]
          %v1313 = vld [vmem:[#allocation2 + $0x220] sm:$0xff]
          %v1314 = vld [vmem:[#allocation2 + $0x228] sm:$0xff]
          %v1315 = vld [vmem:[#allocation2 + $0x230] sm:$0xff]
          %v1316 = vld [vmem:[#allocation2 + $0x238] sm:$0xff]
          %v1317 = vld [vmem:[#allocation2 + $0x240] sm:$0xff]
          %v1318 = vld [vmem:[#allocation2 + $0x248] sm:$0xff]
          %v1319 = vld [vmem:[#allocation2 + $0x250] sm:$0xff]
          %v1320 = vld [vmem:[#allocation2 + $0x258] sm:$0xff]
          %v1321 = vld [vmem:[#allocation2 + $0x260] sm:$0xff]
          %v1322 = vld [vmem:[#allocation2 + $0x268] sm:$0xff]
          %v1323 = vld [vmem:[#allocation2 + $0x270] sm:$0xff]
          %v1324 = vld [vmem:[#allocation2 + $0x278] sm:$0xff]
          %v1325 = vld [vmem:[#allocation2 + $0x280] sm:$0xff]
          %v1326 = vld [vmem:[#allocation2 + $0x288] sm:$0xff]
          %v1327 = vld [vmem:[#allocation2 + $0x290] sm:$0xff]
          %v1328 = vld [vmem:[#allocation2 + $0x298] sm:$0xff]
          %v1329 = vld [vmem:[#allocation2 + $0x2a0] sm:$0xff]
          %v1330 = vld [vmem:[#allocation2 + $0x2a8] sm:$0xff]
          %v1331 = vld [vmem:[#allocation2 + $0x2b0] sm:$0xff]
          %v1332 = vld [vmem:[#allocation2 + $0x2b8] sm:$0xff]
          %v1333 = vld [vmem:[#allocation2 + $0x2c0] sm:$0xff]
          %v1334 = vld [vmem:[#allocation2 + $0x2c8] sm:$0xff]
          %v1335 = vld [vmem:[#allocation2 + $0x2d0] sm:$0xff]
          %v1336 = vld [vmem:[#allocation2 + $0x2d8] sm:$0xff]
          %v1337 = vld [vmem:[#allocation2 + $0x2e0] sm:$0xff]
          %v1338 = vld [vmem:[#allocation2 + $0x2e8] sm:$0xff]
          %v1339 = vld [vmem:[#allocation2 + $0x2f0] sm:$0xff]
          %v1340 = vld [vmem:[#allocation2 + $0x2f8] sm:$0xff]
          %1341 = vst [vmem:[%s195] sm:$0xff] %v1245
          %1342 = vst [vmem:[%s195 + $0x8] sm:$0xff] %v1246
          %1343 = vst [vmem:[%s195 + $0x10] sm:$0xff] %v1247
          %1344 = vst [vmem:[%s195 + $0x18] sm:$0xff] %v1248
          %1345 = vst [vmem:[%s195 + $0x20] sm:$0xff] %v1249
          %1346 = vst [vmem:[%s195 + $0x28] sm:$0xff] %v1250
          %1347 = vst [vmem:[%s195 + $0x30] sm:$0xff] %v1251
          %1348 = vst [vmem:[%s195 + $0x38] sm:$0xff] %v1252
          %1349 = vst [vmem:[%s195 + $0x40] sm:$0xff] %v1253
          %1350 = vst [vmem:[%s195 + $0x48] sm:$0xff] %v1254
          %1351 = vst [vmem:[%s195 + $0x50] sm:$0xff] %v1255
          %1352 = vst [vmem:[%s195 + $0x58] sm:$0xff] %v1256
          %1353 = vst [vmem:[%s195 + $0x60] sm:$0xff] %v1257
          %1354 = vst [vmem:[%s195 + $0x68] sm:$0xff] %v1258
          %1355 = vst [vmem:[%s195 + $0x70] sm:$0xff] %v1259
          %1356 = vst [vmem:[%s195 + $0x78] sm:$0xff] %v1260
          %1357 = vst [vmem:[%s195 + $0x80] sm:$0xff] %v1261
          %1358 = vst [vmem:[%s195 + $0x88] sm:$0xff] %v1262
          %1359 = vst [vmem:[%s195 + $0x90] sm:$0xff] %v1263
          %1360 = vst [vmem:[%s195 + $0x98] sm:$0xff] %v1264
          %1361 = vst [vmem:[%s195 + $0xa0] sm:$0xff] %v1265
          %1362 = vst [vmem:[%s195 + $0xa8] sm:$0xff] %v1266
          %1363 = vst [vmem:[%s195 + $0xb0] sm:$0xff] %v1267
          %1364 = vst [vmem:[%s195 + $0xb8] sm:$0xff] %v1268
          %1365 = vst [vmem:[%s195 + $0xc0] sm:$0xff] %v1269
          %1366 = vst [vmem:[%s195 + $0xc8] sm:$0xff] %v1270
          %1367 = vst [vmem:[%s195 + $0xd0] sm:$0xff] %v1271
          %1368 = vst [vmem:[%s195 + $0xd8] sm:$0xff] %v1272
          %1369 = vst [vmem:[%s195 + $0xe0] sm:$0xff] %v1273
          %1370 = vst [vmem:[%s195 + $0xe8] sm:$0xff] %v1274
          %1371 = vst [vmem:[%s195 + $0xf0] sm:$0xff] %v1275
          %1372 = vst [vmem:[%s195 + $0xf8] sm:$0xff] %v1276
          %1373 = vst [vmem:[%s195 + $0x100] sm:$0xff] %v1277
          %1374 = vst [vmem:[%s195 + $0x108] sm:$0xff] %v1278
          %1375 = vst [vmem:[%s195 + $0x110] sm:$0xff] %v1279
          %1376 = vst [vmem:[%s195 + $0x118] sm:$0xff] %v1280
          %1377 = vst [vmem:[%s195 + $0x120] sm:$0xff] %v1281
          %1378 = vst [vmem:[%s195 + $0x128] sm:$0xff] %v1282
          %1379 = vst [vmem:[%s195 + $0x130] sm:$0xff] %v1283
          %1380 = vst [vmem:[%s195 + $0x138] sm:$0xff] %v1284
          %1381 = vst [vmem:[%s195 + $0x140] sm:$0xff] %v1285
          %1382 = vst [vmem:[%s195 + $0x148] sm:$0xff] %v1286
          %1383 = vst [vmem:[%s195 + $0x150] sm:$0xff] %v1287
          %1384 = vst [vmem:[%s195 + $0x158] sm:$0xff] %v1288
          %1385 = vst [vmem:[%s195 + $0x160] sm:$0xff] %v1289
          %1386 = vst [vmem:[%s195 + $0x168] sm:$0xff] %v1290
          %1387 = vst [vmem:[%s195 + $0x170] sm:$0xff] %v1291
          %1388 = vst [vmem:[%s195 + $0x178] sm:$0xff] %v1292
          %1389 = vst [vmem:[%s195 + $0x180] sm:$0xff] %v1293
          %1390 = vst [vmem:[%s195 + $0x188] sm:$0xff] %v1294
          %1391 = vst [vmem:[%s195 + $0x190] sm:$0xff] %v1295
          %1392 = vst [vmem:[%s195 + $0x198] sm:$0xff] %v1296
          %1393 = vst [vmem:[%s195 + $0x1a0] sm:$0xff] %v1297
          %1394 = vst [vmem:[%s195 + $0x1a8] sm:$0xff] %v1298
          %1395 = vst [vmem:[%s195 + $0x1b0] sm:$0xff] %v1299
          %1396 = vst [vmem:[%s195 + $0x1b8] sm:$0xff] %v1300
          %1397 = vst [vmem:[%s195 + $0x1c0] sm:$0xff] %v1301
          %1398 = vst [vmem:[%s195 + $0x1c8] sm:$0xff] %v1302
          %1399 = vst [vmem:[%s195 + $0x1d0] sm:$0xff] %v1303
          %1400 = vst [vmem:[%s195 + $0x1d8] sm:$0xff] %v1304
          %1401 = vst [vmem:[%s195 + $0x1e0] sm:$0xff] %v1305
          %1402 = vst [vmem:[%s195 + $0x1e8] sm:$0xff] %v1306
          %1403 = vst [vmem:[%s195 + $0x1f0] sm:$0xff] %v1307
          %1404 = vst [vmem:[%s195 + $0x1f8] sm:$0xff] %v1308
          %1405 = vst [vmem:[%s195 + $0x200] sm:$0xff] %v1309
          %1406 = vst [vmem:[%s195 + $0x208] sm:$0xff] %v1310
          %1407 = vst [vmem:[%s195 + $0x210] sm:$0xff] %v1311
          %1408 = vst [vmem:[%s195 + $0x218] sm:$0xff] %v1312
          %1409 = vst [vmem:[%s195 + $0x220] sm:$0xff] %v1313
          %1410 = vst [vmem:[%s195 + $0x228] sm:$0xff] %v1314
          %1411 = vst [vmem:[%s195 + $0x230] sm:$0xff] %v1315
          %1412 = vst [vmem:[%s195 + $0x238] sm:$0xff] %v1316
          %1413 = vst [vmem:[%s195 + $0x240] sm:$0xff] %v1317
          %1414 = vst [vmem:[%s195 + $0x248] sm:$0xff] %v1318
          %1415 = vst [vmem:[%s195 + $0x250] sm:$0xff] %v1319
          %1416 = vst [vmem:[%s195 + $0x258] sm:$0xff] %v1320
          %1417 = vst [vmem:[%s195 + $0x260] sm:$0xff] %v1321
          %1418 = vst [vmem:[%s195 + $0x268] sm:$0xff] %v1322
          %1419 = vst [vmem:[%s195 + $0x270] sm:$0xff] %v1323
          %1420 = vst [vmem:[%s195 + $0x278] sm:$0xff] %v1324
          %1421 = vst [vmem:[%s195 + $0x280] sm:$0xff] %v1325
          %1422 = vst [vmem:[%s195 + $0x288] sm:$0xff] %v1326
          %1423 = vst [vmem:[%s195 + $0x290] sm:$0xff] %v1327
          %1424 = vst [vmem:[%s195 + $0x298] sm:$0xff] %v1328
          %1425 = vst [vmem:[%s195 + $0x2a0] sm:$0xff] %v1329
          %1426 = vst [vmem:[%s195 + $0x2a8] sm:$0xff] %v1330
          %1427 = vst [vmem:[%s195 + $0x2b0] sm:$0xff] %v1331
          %1428 = vst [vmem:[%s195 + $0x2b8] sm:$0xff] %v1332
          %1429 = vst [vmem:[%s195 + $0x2c0] sm:$0xff] %v1333
          %1430 = vst [vmem:[%s195 + $0x2c8] sm:$0xff] %v1334
          %1431 = vst [vmem:[%s195 + $0x2d0] sm:$0xff] %v1335
          %1432 = vst [vmem:[%s195 + $0x2d8] sm:$0xff] %v1336
          %1433 = vst [vmem:[%s195 + $0x2e0] sm:$0xff] %v1337
          %1434 = vst [vmem:[%s195 + $0x2e8] sm:$0xff] %v1338
          %1435 = vst [vmem:[%s195 + $0x2f0] sm:$0xff] %v1339
          %1436 = vst [vmem:[%s195 + $0x2f8] sm:$0xff] %v1340
        $region36: #{tpu_custom_call.1} parent=27 // pred_fallthru
          _
        %s1437 = sand.u32 %s101, 1
        %s1438 = scalar_lea.sflag [#allocation4], %s1437
        %s1439 = sand.u32 %s101, 1
        %s1440 = smul.addr %s1439, 768
        %s1441 = scalar_lea.vmem [#allocation3], %s1440
        // Predicated region
        $region37: #{tpu_custom_call.1} parent=27 // pred_check
          %p1442 = pneg %p111
        $region38: #{tpu_custom_call.1} parent=27 // pred_check_branch
          %1444 = sbr.rel (%p1442) target = $region40
        $region39: #{tpu_custom_call.1} parent=27 // pred_region
          %s1445 = smul.u32 32, %s21
          %s1446 = smul.u32 3, %s22
          %s1448 = ssub.s32 12288, 12288
          %1449 = vsyncadd %s1438, %s1448
          %s1450 = smul.addr %s1445, 3
          %s1451 = sadd.s32 %s1446, %s1450
          %s1452 = smul.addr %s1451, 128
          %s1453 = scalar_lea.hbm %s2, %s1452
          %s1454 = sshll.u32 %s1441, 4
          %s1455 = int_to_ptr.vmem [resolvable:$true] %s1454
          %1460 = dma.vmem_to_hbm [thread:$0]  %s1455, 12288, %s1453, %s1438, 384, 384, 24
        $region40: #{tpu_custom_call.1} parent=27 // pred_fallthru
          _
      $region28: #{tpu_custom_call.1} parent=5 // pred_fallthru
        _
      %p1461 = scmp.le.s32.totalorder 2, %s11
      // Predicated region
      $region41: #{tpu_custom_call.1} parent=5 // pred_check
        %p1462 = pneg %p1461
      $region42: #{tpu_custom_call.1} parent=5 // pred_check_branch
        %1464 = sbr.rel (%p1462) target = $region44
      $region43: #{tpu_custom_call.1} parent=5 // pred_region
        %s1465 = ssub.s32 %s11, 2
        // Predicated region
        $region45: #{tpu_custom_call.1} parent=43 // pred_check
          %p1466 = pneg %p117
        $region46: #{tpu_custom_call.1} parent=43 // pred_check_branch
          %1468 = sbr.rel (%p1466) target = $region48
        $region47: #{tpu_custom_call.1} parent=43 // pred_region
          %s1469 = sand.u32 %s102, 1
          %s1470 = scalar_lea.sflag [#allocation4], %s1469
          %s1471 = sand.u32 %s102, 1
          %s1472 = smul.addr %s1471, 768
          %s1473 = scalar_lea.vmem [#allocation3], %s1472
          %1474 = dma.done %s1470, 12288
        $region48: #{tpu_custom_call.1} parent=43 // pred_fallthru
          _
      $region44: #{tpu_custom_call.1} parent=5 // pred_fallthru
        _
    $region6: #{tpu_custom_call.1} parent=1 // loop_footer
      %s15 = sadd.s32 1, %s11
    $region7: #{tpu_custom_call.1} parent=1 // loop_footer_branch
      %10 = sbr.rel target = $region3
    $region8: #{tpu_custom_call.1} parent=1 // loop_exit
      _
    %1475 = vsyncpa [#allocation4], 1
    %s1476 = scalar_lea.sflag [#allocation4], 1
    %1477 = vsyncpa %s1476, 1

</llo_original>
